<compile_context>
chip_gen: v7x
topology: tpu7x:2x2x1
jax: 0.10.0
libtpu: 0.0.40
codegen_flags: <defaults>
</compile_context>

<pallas_src>
import functools

import jax
import jax.numpy as jnp
from jax import lax
from jax.experimental import pallas as pl
from jax.experimental.pallas import tpu as pltpu


def _attention_kernel(x_ref, wqkv_ref, wproj_ref, bproj_ref,
                      out_ref, attn_ref, qkv_ref, ctx_ref,
                      *, num_heads, head_dim, n_valid, approx_recip):
    # x_ref:     (1, Np, C)      one batch element (compute dtype, e.g. bf16)
    # wqkv_ref:  (C, 3C)         resident, per-head contiguous [q*scale|k|v]
    # wproj_ref: (C, C)          resident, transposed projection weight
    # bproj_ref: (1, C)          projection bias (f32)
    # out_ref:   (1, Np, C)
    # attn_ref:  (1, H, Np, Np)  attention probabilities
    # qkv_ref:   (Np, 3C)        VMEM scratch (compute dtype)
    # ctx_ref:   (Np, C)         VMEM scratch (compute dtype)
    cdtype = x_ref.dtype
    n_pad = x_ref.shape[1]

    x = x_ref[0]                                               # (Np, C)
    # Full-width qkv projection; scale already folded into the q columns.
    qkv_ref[...] = jnp.dot(x, wqkv_ref[...],
                           preferred_element_type=jnp.float32).astype(cdtype)

    key_mask = None
    if n_valid < n_pad:
        key_ids = lax.broadcasted_iota(jnp.int32, (n_pad, n_pad), 1)
        key_mask = key_ids < n_valid

    for h in range(num_heads):                     # static unrolled head loop
        c0 = 3 * head_dim * h
        qh = qkv_ref[:, c0:c0 + head_dim]                      # (Np, hd)
        kh = qkv_ref[:, c0 + head_dim:c0 + 2 * head_dim]       # (Np, hd)
        vh = qkv_ref[:, c0 + 2 * head_dim:c0 + 3 * head_dim]   # (Np, hd)

        # scores = q @ k^T, K consumed transposed by the MXU (no relayout)
        s = lax.dot_general(qh, kh, (((1,), (1,)), ((), ())),
                            preferred_element_type=jnp.float32)  # (Np, Np)
        if key_mask is not None:
            s = jnp.where(key_mask, s, jnp.float32(-1e30))

        # numerically-stable softmax in f32; divide goes to the EUP slot
        s = s - jnp.max(s, axis=-1, keepdims=True)
        e = jnp.exp(s)
        denom = jnp.sum(e, axis=-1, keepdims=True)
        if approx_recip:
            p = e * pl.reciprocal(denom, approx=True)
        else:
            p = e / denom

        p_c = p.astype(cdtype)
        if attn_ref.dtype == p_c.dtype:
            attn_ref[0, h] = p_c                   # single cast reused below
        else:
            attn_ref[0, h] = p.astype(attn_ref.dtype)

        oh = jnp.dot(p_c, vh, preferred_element_type=jnp.float32)  # (Np, hd)
        ctx_ref[:, h * head_dim:(h + 1) * head_dim] = oh.astype(cdtype)

    # One full-depth output projection for all heads.
    out_ref[0] = (jnp.dot(ctx_ref[...], wproj_ref[...],
                          preferred_element_type=jnp.float32)
                  + bproj_ref[...]).astype(out_ref.dtype)


def attention_forward(x, w_qkv, w_proj, b_proj, num_heads,
                      compute_dtype=jnp.bfloat16, attn_dtype=None,
                      approx_reciprocal=True):
    """x: (B, N, C); w_qkv: (3C, C); w_proj: (C, C); b_proj: (C,)."""
    B, N, C = x.shape
    H = num_heads
    assert C % H == 0
    hd = C // H
    scale = hd ** -0.5
    if attn_dtype is None:
        # bf16 attn output halves the dominant HBM write stream; pass
        # attn_dtype=x.dtype for bit-width parity with the PyTorch module.
        attn_dtype = compute_dtype

    # Sublane-align the token axis (padded keys masked inside the kernel).
    Np = ((N + 7) // 8) * 8

    w_qkv = jnp.asarray(w_qkv, jnp.float32)
    w_proj = jnp.asarray(w_proj, jnp.float32)
    b_proj = jnp.asarray(b_proj, jnp.float32)

    # (C, 3C) with per-head contiguous [q*scale | k | v] columns.
    wq = (w_qkv[0:C] * scale).reshape(H, hd, C)
    wk = w_qkv[C:2 * C].reshape(H, hd, C)
    wv = w_qkv[2 * C:3 * C].reshape(H, hd, C)
    wqkv_t = (jnp.concatenate([wq, wk, wv], axis=1)      # (H, 3*hd, C)
              .reshape(3 * C, C).T).astype(compute_dtype)
    wproj_t = w_proj.T.astype(compute_dtype)             # (C, C)
    bproj = b_proj.reshape(1, C).astype(jnp.float32)

    x_p = x if Np == N else jnp.pad(x, ((0, 0), (0, Np - N), (0, 0)))
    x_c = x_p.astype(compute_dtype)

    # Re-derived VMEM plan (valid down to v7x's 64 MiB physical VMEM).
    cb = jnp.dtype(compute_dtype).itemsize
    b_in = Np * C * cb
    b_out = Np * C * jnp.dtype(x.dtype).itemsize
    b_attn = H * Np * Np * jnp.dtype(attn_dtype).itemsize
    b_w = (3 * C * C + C * C) * cb + C * 4
    b_scr = (Np * 3 * C + Np * C) * cb
    vmem_est = 2 * (b_in + b_out + b_attn + b_w) + b_scr
    vmem_limit = int(min(max(2 * vmem_est, 32 * 1024 * 1024),
                         64 * 1024 * 1024))

    kernel = functools.partial(_attention_kernel,
                               num_heads=H, head_dim=hd, n_valid=N,
                               approx_recip=approx_reciprocal)

    out_p, attn_p = pl.pallas_call(
        kernel,
        out_shape=(
            jax.ShapeDtypeStruct((B, Np, C), x.dtype),
            jax.ShapeDtypeStruct((B, H, Np, Np), attn_dtype),
        ),
        grid_spec=pltpu.PrefetchScalarGridSpec(
            num_scalar_prefetch=0,
            grid=(B,),
            in_specs=[
                pl.BlockSpec((1, Np, C), lambda b: (b, 0, 0)),
                pl.BlockSpec((C, 3 * C), lambda b: (0, 0)),   # resident weights
                pl.BlockSpec((C, C), lambda b: (0, 0)),       # resident weights
                pl.BlockSpec((1, C), lambda b: (0, 0)),       # resident bias
            ],
            out_specs=[
                pl.BlockSpec((1, Np, C), lambda b: (b, 0, 0)),
                pl.BlockSpec((1, H, Np, Np), lambda b: (b, 0, 0, 0)),
            ],
            scratch_shapes=[
                pltpu.VMEM((Np, 3 * C), compute_dtype),   # qkv staging
                pltpu.VMEM((Np, C), compute_dtype),       # per-head context
            ],
        ),
        compiler_params=pltpu.CompilerParams(
            dimension_semantics=("parallel",),
            vmem_limit_bytes=vmem_limit),
    )(x_c, wqkv_t, wproj_t, bproj)

    if Np != N:
        out_p = out_p[:, :N, :]
        attn_p = attn_p[:, :, :N, :N]
    return out_p, attn_p


def attention_reference(x, w_qkv, w_proj, b_proj, num_heads):
    """Plain-JAX (f32) replica of the PyTorch forward, for verification."""
    B, N, C = x.shape
    hd = C // num_heads
    scale = hd ** -0.5
    qkv = jnp.einsum('bnc,oc->bno', x, w_qkv)                     # (B,N,3C)
    qkv = qkv.reshape(B, N, 3, num_heads, hd).transpose(2, 0, 3, 1, 4)
    q, k, v = qkv[0], qkv[1], qkv[2]                              # (B,H,N,hd)
    attn = jnp.einsum('bhnd,bhmd->bhnm', q, k) * scale
    attn = jax.nn.softmax(attn, axis=-1)
    ctx = jnp.einsum('bhnm,bhmd->bhnd', attn, v)                  # (B,H,N,hd)
    ctx = ctx.transpose(0, 2, 1, 3).reshape(B, N, C)
    out = jnp.einsum('bnc,oc->bno', ctx, w_proj) + b_proj
    return out, attn


if __name__ == "__main__":
    B, N, C = 2, 8, 32
    num_heads = 8

    key = jax.random.PRNGKey(0)
    kx, kw1, kw2, kb = jax.random.split(key, 4)
    x = jax.random.normal(kx, (B, N, C), dtype=jnp.float32)
    # nn.Linear(dim, dim*3, bias=False) -> weight (3C, C)
    w_qkv = jax.random.normal(kw1, (3 * C, C), dtype=jnp.float32) * 0.05
    # nn.Linear(dim, dim) -> weight (C, C), bias (C,)
    w_proj = jax.random.normal(kw2, (C, C), dtype=jnp.float32) * 0.05
    b_proj = jax.random.normal(kb, (C,), dtype=jnp.float32) * 0.05

    out, attn = attention_forward(x, w_qkv, w_proj, b_proj, num_heads)
    out = jax.block_until_ready(out)
    attn = jax.block_until_ready(attn)

    out_ref, attn_ref = attention_reference(x, w_qkv, w_proj, b_proj, num_heads)
    assert out.shape == (B, N, C) and attn.shape == (B, num_heads, N, N)
    # Tolerance accounts for bf16 matmul operands / bf16 attn output + EUP
    # approximate reciprocal (f32 accumulation keeps the error well below it).
    assert jnp.allclose(out, out_ref, atol=2e-2, rtol=2e-2)
    assert jnp.allclose(attn.astype(jnp.float32), attn_ref, atol=2e-2, rtol=2e-2)

    print("KERNEL_OK")
</pallas_src>

<mosaic_0001>
module attributes {stable_mosaic.version = 11 : i64} {
  func.func @_attention_kernel(%arg0: i32, %arg1: memref<1x8x32xbf16, #tpu.memory_space<vmem>>, %arg2: memref<32x96xbf16, #tpu.memory_space<vmem>>, %arg3: memref<32x32xbf16, #tpu.memory_space<vmem>>, %arg4: memref<1x32xf32, #tpu.memory_space<vmem>>, %arg5: memref<1x8x32xf32, #tpu.memory_space<vmem>>, %arg6: memref<1x8x8x8xbf16, #tpu.memory_space<vmem>>, %arg7: memref<8x96xbf16, #tpu.memory_space<vmem>>, %arg8: memref<8x32xbf16, #tpu.memory_space<vmem>>) attributes {dimension_semantics = [#tpu.dimension_semantics<parallel>], iteration_bounds = array<i64: 2>, scalar_prefetch = 0 : i64, scratch_operands = 2 : i64, tpu.core_type = #tpu.core_type<tc>, window_params = [{transform_indices = @transform_0, window_bounds = array<i64: 1, 8, 32>}, {pipeline_mode = #tpu.pipeline_mode<synchronous>, transform_indices = @transform_1, window_bounds = array<i64: 32, 96>}, {pipeline_mode = #tpu.pipeline_mode<synchronous>, transform_indices = @transform_2, window_bounds = array<i64: 32, 32>}, {pipeline_mode = #tpu.pipeline_mode<synchronous>, transform_indices = @transform_3, window_bounds = array<i64: 1, 32>}, {transform_indices = @transform_4, window_bounds = array<i64: 1, 8, 32>}, {transform_indices = @transform_5, window_bounds = array<i64: 1, 8, 8, 8>}]} {
    %c0 = arith.constant 0 : index
    %c0_0 = arith.constant 0 : index
    %c0_1 = arith.constant 0 : index
    %0 = vector.load %arg1[%c0, %c0_0, %c0_1] : memref<1x8x32xbf16, #tpu.memory_space<vmem>>, vector<1x8x32xbf16>
    %1 = vector.shape_cast %0 : vector<1x8x32xbf16> to vector<8x32xbf16>
    %c0_2 = arith.constant 0 : index
    %c0_3 = arith.constant 0 : index
    %2 = vector.load %arg2[%c0_2, %c0_3] : memref<32x96xbf16, #tpu.memory_space<vmem>>, vector<32x96xbf16>
    %cst = arith.constant dense<0.000000e+00> : vector<8x96xf32>
    %3 = tpu.matmul %1, %2, %cst {dimension_numbers = #tpu.dot_dimension_numbers<[1], [0], [0], [1], [0, 0, 1, 1], [], []>} : vector<8x32xbf16>, vector<32x96xbf16>, vector<8x96xf32> -> vector<8x96xf32>
    %4 = arith.truncf %3 : vector<8x96xf32> to vector<8x96xbf16>
    %c0_4 = arith.constant 0 : index
    %c0_5 = arith.constant 0 : index
    %5 = vector.load %arg7[%c0_4, %c0_5] : memref<8x96xbf16, #tpu.memory_space<vmem>>, vector<8x96xbf16>
    tpu.vector_store %arg7[%c0_4, %c0_5], %4 {strides = array<i32>} : memref<8x96xbf16, #tpu.memory_space<vmem>>, vector<8x96xbf16>,
    %c0_6 = arith.constant 0 : index
    %c0_7 = arith.constant 0 : index
    %6 = vector.load %arg7[%c0_6, %c0_7] : memref<8x96xbf16, #tpu.memory_space<vmem>>, vector<8x4xbf16>
    %c0_8 = arith.constant 0 : index
    %c4 = arith.constant 4 : index
    %7 = vector.load %arg7[%c0_8, %c4] : memref<8x96xbf16, #tpu.memory_space<vmem>>, vector<8x4xbf16>
    %c0_9 = arith.constant 0 : index
    %c8 = arith.constant 8 : index
    %8 = vector.load %arg7[%c0_9, %c8] : memref<8x96xbf16, #tpu.memory_space<vmem>>, vector<8x4xbf16>
    %cst_10 = arith.constant dense<0.000000e+00> : vector<8x8xf32>
    %9 = tpu.matmul %6, %7, %cst_10 {dimension_numbers = #tpu.dot_dimension_numbers<[1], [1], [0], [0], [0, 0, 1, 0], [], []>} : vector<8x4xbf16>, vector<8x4xbf16>, vector<8x8xf32> -> vector<8x8xf32>
    %cst_11 = arith.constant dense<0xFF800000> : vector<8xf32>
    %10 = vector.multi_reduction <maximumf>, %9, %cst_11 [1] : vector<8x8xf32> to vector<8xf32>
    %11 = vector.shape_cast %10 : vector<8xf32> to vector<8x1xf32>
    %12 = vector.broadcast %11 : vector<8x1xf32> to vector<8x8xf32>
    %13 = arith.subf %9, %12 : vector<8x8xf32>
    %14 = math.exp %13 : vector<8x8xf32>
    %cst_12 = arith.constant dense<0.000000e+00> : vector<8xf32>
    %15 = vector.multi_reduction <add>, %14, %cst_12 [1] : vector<8x8xf32> to vector<8xf32>
    %16 = vector.shape_cast %15 : vector<8xf32> to vector<8x1xf32>
    %17 = tpu.reciprocal %16 {approx = true} : vector<8x1xf32> -> vector<8x1xf32>
    %18 = vector.broadcast %17 : vector<8x1xf32> to vector<8x8xf32>
    %19 = arith.mulf %14, %18 : vector<8x8xf32>
    %20 = arith.truncf %19 : vector<8x8xf32> to vector<8x8xbf16>
    %c0_13 = arith.constant 0 : index
    %c0_14 = arith.constant 0 : index
    %c0_15 = arith.constant 0 : index
    %c0_16 = arith.constant 0 : index
    %21 = vector.load %arg6[%c0_13, %c0_14, %c0_15, %c0_16] : memref<1x8x8x8xbf16, #tpu.memory_space<vmem>>, vector<1x1x8x8xbf16>
    %22 = vector.shape_cast %21 : vector<1x1x8x8xbf16> to vector<8x8xbf16>
    %23 = vector.shape_cast %20 : vector<8x8xbf16> to vector<1x1x8x8xbf16>
    tpu.vector_store %arg6[%c0_13, %c0_14, %c0_15, %c0_16], %23 {strides = array<i32>} : memref<1x8x8x8xbf16, #tpu.memory_space<vmem>>, vector<1x1x8x8xbf16>,
    %cst_17 = arith.constant dense<0.000000e+00> : vector<8x4xf32>
    %24 = tpu.matmul %20, %8, %cst_17 {dimension_numbers = #tpu.dot_dimension_numbers<[1], [0], [0], [1], [0, 0, 1, 1], [], []>} : vector<8x8xbf16>, vector<8x4xbf16>, vector<8x4xf32> -> vector<8x4xf32>
    %25 = arith.truncf %24 : vector<8x4xf32> to vector<8x4xbf16>
    %c0_18 = arith.constant 0 : index
    %c0_19 = arith.constant 0 : index
    %26 = vector.load %arg8[%c0_18, %c0_19] : memref<8x32xbf16, #tpu.memory_space<vmem>>, vector<8x4xbf16>
    tpu.vector_store %arg8[%c0_18, %c0_19], %25 {strides = array<i32>} : memref<8x32xbf16, #tpu.memory_space<vmem>>, vector<8x4xbf16>,
    %c0_20 = arith.constant 0 : index
    %c12 = arith.constant 12 : index
    %27 = vector.load %arg7[%c0_20, %c12] : memref<8x96xbf16, #tpu.memory_space<vmem>>, vector<8x4xbf16>
    %c0_21 = arith.constant 0 : index
    %c16 = arith.constant 16 : index
    %28 = vector.load %arg7[%c0_21, %c16] : memref<8x96xbf16, #tpu.memory_space<vmem>>, vector<8x4xbf16>
    %c0_22 = arith.constant 0 : index
    %c20 = arith.constant 20 : index
    %29 = vector.load %arg7[%c0_22, %c20] : memref<8x96xbf16, #tpu.memory_space<vmem>>, vector<8x4xbf16>
    %cst_23 = arith.constant dense<0.000000e+00> : vector<8x8xf32>
    %30 = tpu.matmul %27, %28, %cst_23 {dimension_numbers = #tpu.dot_dimension_numbers<[1], [1], [0], [0], [0, 0, 1, 0], [], []>} : vector<8x4xbf16>, vector<8x4xbf16>, vector<8x8xf32> -> vector<8x8xf32>
    %cst_24 = arith.constant dense<0xFF800000> : vector<8xf32>
    %31 = vector.multi_reduction <maximumf>, %30, %cst_24 [1] : vector<8x8xf32> to vector<8xf32>
    %32 = vector.shape_cast %31 : vector<8xf32> to vector<8x1xf32>
    %33 = vector.broadcast %32 : vector<8x1xf32> to vector<8x8xf32>
    %34 = arith.subf %30, %33 : vector<8x8xf32>
    %35 = math.exp %34 : vector<8x8xf32>
    %cst_25 = arith.constant dense<0.000000e+00> : vector<8xf32>
    %36 = vector.multi_reduction <add>, %35, %cst_25 [1] : vector<8x8xf32> to vector<8xf32>
    %37 = vector.shape_cast %36 : vector<8xf32> to vector<8x1xf32>
    %38 = tpu.reciprocal %37 {approx = true} : vector<8x1xf32> -> vector<8x1xf32>
    %39 = vector.broadcast %38 : vector<8x1xf32> to vector<8x8xf32>
    %40 = arith.mulf %35, %39 : vector<8x8xf32>
    %41 = arith.truncf %40 : vector<8x8xf32> to vector<8x8xbf16>
    %c0_26 = arith.constant 0 : index
    %c1 = arith.constant 1 : index
    %c0_27 = arith.constant 0 : index
    %c0_28 = arith.constant 0 : index
    %42 = vector.load %arg6[%c0_26, %c1, %c0_27, %c0_28] : memref<1x8x8x8xbf16, #tpu.memory_space<vmem>>, vector<1x1x8x8xbf16>
    %43 = vector.shape_cast %42 : vector<1x1x8x8xbf16> to vector<8x8xbf16>
    %44 = vector.shape_cast %41 : vector<8x8xbf16> to vector<1x1x8x8xbf16>
    tpu.vector_store %arg6[%c0_26, %c1, %c0_27, %c0_28], %44 {strides = array<i32>} : memref<1x8x8x8xbf16, #tpu.memory_space<vmem>>, vector<1x1x8x8xbf16>,
    %cst_29 = arith.constant dense<0.000000e+00> : vector<8x4xf32>
    %45 = tpu.matmul %41, %29, %cst_29 {dimension_numbers = #tpu.dot_dimension_numbers<[1], [0], [0], [1], [0, 0, 1, 1], [], []>} : vector<8x8xbf16>, vector<8x4xbf16>, vector<8x4xf32> -> vector<8x4xf32>
    %46 = arith.truncf %45 : vector<8x4xf32> to vector<8x4xbf16>
    %c0_30 = arith.constant 0 : index
    %c4_31 = arith.constant 4 : index
    %47 = vector.load %arg8[%c0_30, %c4_31] : memref<8x32xbf16, #tpu.memory_space<vmem>>, vector<8x4xbf16>
    tpu.vector_store %arg8[%c0_30, %c4_31], %46 {strides = array<i32>} : memref<8x32xbf16, #tpu.memory_space<vmem>>, vector<8x4xbf16>,
    %c0_32 = arith.constant 0 : index
    %c24 = arith.constant 24 : index
    %48 = vector.load %arg7[%c0_32, %c24] : memref<8x96xbf16, #tpu.memory_space<vmem>>, vector<8x4xbf16>
    %c0_33 = arith.constant 0 : index
    %c28 = arith.constant 28 : index
    %49 = vector.load %arg7[%c0_33, %c28] : memref<8x96xbf16, #tpu.memory_space<vmem>>, vector<8x4xbf16>
    %c0_34 = arith.constant 0 : index
    %c32 = arith.constant 32 : index
    %50 = vector.load %arg7[%c0_34, %c32] : memref<8x96xbf16, #tpu.memory_space<vmem>>, vector<8x4xbf16>
    %cst_35 = arith.constant dense<0.000000e+00> : vector<8x8xf32>
    %51 = tpu.matmul %48, %49, %cst_35 {dimension_numbers = #tpu.dot_dimension_numbers<[1], [1], [0], [0], [0, 0, 1, 0], [], []>} : vector<8x4xbf16>, vector<8x4xbf16>, vector<8x8xf32> -> vector<8x8xf32>
    %cst_36 = arith.constant dense<0xFF800000> : vector<8xf32>
    %52 = vector.multi_reduction <maximumf>, %51, %cst_36 [1] : vector<8x8xf32> to vector<8xf32>
    %53 = vector.shape_cast %52 : vector<8xf32> to vector<8x1xf32>
    %54 = vector.broadcast %53 : vector<8x1xf32> to vector<8x8xf32>
    %55 = arith.subf %51, %54 : vector<8x8xf32>
    %56 = math.exp %55 : vector<8x8xf32>
    %cst_37 = arith.constant dense<0.000000e+00> : vector<8xf32>
    %57 = vector.multi_reduction <add>, %56, %cst_37 [1] : vector<8x8xf32> to vector<8xf32>
    %58 = vector.shape_cast %57 : vector<8xf32> to vector<8x1xf32>
    %59 = tpu.reciprocal %58 {approx = true} : vector<8x1xf32> -> vector<8x1xf32>
    %60 = vector.broadcast %59 : vector<8x1xf32> to vector<8x8xf32>
    %61 = arith.mulf %56, %60 : vector<8x8xf32>
    %62 = arith.truncf %61 : vector<8x8xf32> to vector<8x8xbf16>
    %c0_38 = arith.constant 0 : index
    %c2 = arith.constant 2 : index
    %c0_39 = arith.constant 0 : index
    %c0_40 = arith.constant 0 : index
    %63 = vector.load %arg6[%c0_38, %c2, %c0_39, %c0_40] : memref<1x8x8x8xbf16, #tpu.memory_space<vmem>>, vector<1x1x8x8xbf16>
    %64 = vector.shape_cast %63 : vector<1x1x8x8xbf16> to vector<8x8xbf16>
    %65 = vector.shape_cast %62 : vector<8x8xbf16> to vector<1x1x8x8xbf16>
    tpu.vector_store %arg6[%c0_38, %c2, %c0_39, %c0_40], %65 {strides = array<i32>} : memref<1x8x8x8xbf16, #tpu.memory_space<vmem>>, vector<1x1x8x8xbf16>,
    %cst_41 = arith.constant dense<0.000000e+00> : vector<8x4xf32>
    %66 = tpu.matmul %62, %50, %cst_41 {dimension_numbers = #tpu.dot_dimension_numbers<[1], [0], [0], [1], [0, 0, 1, 1], [], []>} : vector<8x8xbf16>, vector<8x4xbf16>, vector<8x4xf32> -> vector<8x4xf32>
    %67 = arith.truncf %66 : vector<8x4xf32> to vector<8x4xbf16>
    %c0_42 = arith.constant 0 : index
    %c8_43 = arith.constant 8 : index
    %68 = vector.load %arg8[%c0_42, %c8_43] : memref<8x32xbf16, #tpu.memory_space<vmem>>, vector<8x4xbf16>
    tpu.vector_store %arg8[%c0_42, %c8_43], %67 {strides = array<i32>} : memref<8x32xbf16, #tpu.memory_space<vmem>>, vector<8x4xbf16>,
    %c0_44 = arith.constant 0 : index
    %c36 = arith.constant 36 : index
    %69 = vector.load %arg7[%c0_44, %c36] : memref<8x96xbf16, #tpu.memory_space<vmem>>, vector<8x4xbf16>
    %c0_45 = arith.constant 0 : index
    %c40 = arith.constant 40 : index
    %70 = vector.load %arg7[%c0_45, %c40] : memref<8x96xbf16, #tpu.memory_space<vmem>>, vector<8x4xbf16>
    %c0_46 = arith.constant 0 : index
    %c44 = arith.constant 44 : index
    %71 = vector.load %arg7[%c0_46, %c44] : memref<8x96xbf16, #tpu.memory_space<vmem>>, vector<8x4xbf16>
    %cst_47 = arith.constant dense<0.000000e+00> : vector<8x8xf32>
    %72 = tpu.matmul %69, %70, %cst_47 {dimension_numbers = #tpu.dot_dimension_numbers<[1], [1], [0], [0], [0, 0, 1, 0], [], []>} : vector<8x4xbf16>, vector<8x4xbf16>, vector<8x8xf32> -> vector<8x8xf32>
    %cst_48 = arith.constant dense<0xFF800000> : vector<8xf32>
    %73 = vector.multi_reduction <maximumf>, %72, %cst_48 [1] : vector<8x8xf32> to vector<8xf32>
    %74 = vector.shape_cast %73 : vector<8xf32> to vector<8x1xf32>
    %75 = vector.broadcast %74 : vector<8x1xf32> to vector<8x8xf32>
    %76 = arith.subf %72, %75 : vector<8x8xf32>
    %77 = math.exp %76 : vector<8x8xf32>
    %cst_49 = arith.constant dense<0.000000e+00> : vector<8xf32>
    %78 = vector.multi_reduction <add>, %77, %cst_49 [1] : vector<8x8xf32> to vector<8xf32>
    %79 = vector.shape_cast %78 : vector<8xf32> to vector<8x1xf32>
    %80 = tpu.reciprocal %79 {approx = true} : vector<8x1xf32> -> vector<8x1xf32>
    %81 = vector.broadcast %80 : vector<8x1xf32> to vector<8x8xf32>
    %82 = arith.mulf %77, %81 : vector<8x8xf32>
    %83 = arith.truncf %82 : vector<8x8xf32> to vector<8x8xbf16>
    %c0_50 = arith.constant 0 : index
    %c3 = arith.constant 3 : index
    %c0_51 = arith.constant 0 : index
    %c0_52 = arith.constant 0 : index
    %84 = vector.load %arg6[%c0_50, %c3, %c0_51, %c0_52] : memref<1x8x8x8xbf16, #tpu.memory_space<vmem>>, vector<1x1x8x8xbf16>
    %85 = vector.shape_cast %84 : vector<1x1x8x8xbf16> to vector<8x8xbf16>
    %86 = vector.shape_cast %83 : vector<8x8xbf16> to vector<1x1x8x8xbf16>
    tpu.vector_store %arg6[%c0_50, %c3, %c0_51, %c0_52], %86 {strides = array<i32>} : memref<1x8x8x8xbf16, #tpu.memory_space<vmem>>, vector<1x1x8x8xbf16>,
    %cst_53 = arith.constant dense<0.000000e+00> : vector<8x4xf32>
    %87 = tpu.matmul %83, %71, %cst_53 {dimension_numbers = #tpu.dot_dimension_numbers<[1], [0], [0], [1], [0, 0, 1, 1], [], []>} : vector<8x8xbf16>, vector<8x4xbf16>, vector<8x4xf32> -> vector<8x4xf32>
    %88 = arith.truncf %87 : vector<8x4xf32> to vector<8x4xbf16>
    %c0_54 = arith.constant 0 : index
    %c12_55 = arith.constant 12 : index
    %89 = vector.load %arg8[%c0_54, %c12_55] : memref<8x32xbf16, #tpu.memory_space<vmem>>, vector<8x4xbf16>
    tpu.vector_store %arg8[%c0_54, %c12_55], %88 {strides = array<i32>} : memref<8x32xbf16, #tpu.memory_space<vmem>>, vector<8x4xbf16>,
    %c0_56 = arith.constant 0 : index
    %c48 = arith.constant 48 : index
    %90 = vector.load %arg7[%c0_56, %c48] : memref<8x96xbf16, #tpu.memory_space<vmem>>, vector<8x4xbf16>
    %c0_57 = arith.constant 0 : index
    %c52 = arith.constant 52 : index
    %91 = vector.load %arg7[%c0_57, %c52] : memref<8x96xbf16, #tpu.memory_space<vmem>>, vector<8x4xbf16>
    %c0_58 = arith.constant 0 : index
    %c56 = arith.constant 56 : index
    %92 = vector.load %arg7[%c0_58, %c56] : memref<8x96xbf16, #tpu.memory_space<vmem>>, vector<8x4xbf16>
    %cst_59 = arith.constant dense<0.000000e+00> : vector<8x8xf32>
    %93 = tpu.matmul %90, %91, %cst_59 {dimension_numbers = #tpu.dot_dimension_numbers<[1], [1], [0], [0], [0, 0, 1, 0], [], []>} : vector<8x4xbf16>, vector<8x4xbf16>, vector<8x8xf32> -> vector<8x8xf32>
    %cst_60 = arith.constant dense<0xFF800000> : vector<8xf32>
    %94 = vector.multi_reduction <maximumf>, %93, %cst_60 [1] : vector<8x8xf32> to vector<8xf32>
    %95 = vector.shape_cast %94 : vector<8xf32> to vector<8x1xf32>
    %96 = vector.broadcast %95 : vector<8x1xf32> to vector<8x8xf32>
    %97 = arith.subf %93, %96 : vector<8x8xf32>
    %98 = math.exp %97 : vector<8x8xf32>
    %cst_61 = arith.constant dense<0.000000e+00> : vector<8xf32>
    %99 = vector.multi_reduction <add>, %98, %cst_61 [1] : vector<8x8xf32> to vector<8xf32>
    %100 = vector.shape_cast %99 : vector<8xf32> to vector<8x1xf32>
    %101 = tpu.reciprocal %100 {approx = true} : vector<8x1xf32> -> vector<8x1xf32>
    %102 = vector.broadcast %101 : vector<8x1xf32> to vector<8x8xf32>
    %103 = arith.mulf %98, %102 : vector<8x8xf32>
    %104 = arith.truncf %103 : vector<8x8xf32> to vector<8x8xbf16>
    %c0_62 = arith.constant 0 : index
    %c4_63 = arith.constant 4 : index
    %c0_64 = arith.constant 0 : index
    %c0_65 = arith.constant 0 : index
    %105 = vector.load %arg6[%c0_62, %c4_63, %c0_64, %c0_65] : memref<1x8x8x8xbf16, #tpu.memory_space<vmem>>, vector<1x1x8x8xbf16>
    %106 = vector.shape_cast %105 : vector<1x1x8x8xbf16> to vector<8x8xbf16>
    %107 = vector.shape_cast %104 : vector<8x8xbf16> to vector<1x1x8x8xbf16>
    tpu.vector_store %arg6[%c0_62, %c4_63, %c0_64, %c0_65], %107 {strides = array<i32>} : memref<1x8x8x8xbf16, #tpu.memory_space<vmem>>, vector<1x1x8x8xbf16>,
    %cst_66 = arith.constant dense<0.000000e+00> : vector<8x4xf32>
    %108 = tpu.matmul %104, %92, %cst_66 {dimension_numbers = #tpu.dot_dimension_numbers<[1], [0], [0], [1], [0, 0, 1, 1], [], []>} : vector<8x8xbf16>, vector<8x4xbf16>, vector<8x4xf32> -> vector<8x4xf32>
    %109 = arith.truncf %108 : vector<8x4xf32> to vector<8x4xbf16>
    %c0_67 = arith.constant 0 : index
    %c16_68 = arith.constant 16 : index
    %110 = vector.load %arg8[%c0_67, %c16_68] : memref<8x32xbf16, #tpu.memory_space<vmem>>, vector<8x4xbf16>
    tpu.vector_store %arg8[%c0_67, %c16_68], %109 {strides = array<i32>} : memref<8x32xbf16, #tpu.memory_space<vmem>>, vector<8x4xbf16>,
    %c0_69 = arith.constant 0 : index
    %c60 = arith.constant 60 : index
    %111 = vector.load %arg7[%c0_69, %c60] : memref<8x96xbf16, #tpu.memory_space<vmem>>, vector<8x4xbf16>
    %c0_70 = arith.constant 0 : index
    %c64 = arith.constant 64 : index
    %112 = vector.load %arg7[%c0_70, %c64] : memref<8x96xbf16, #tpu.memory_space<vmem>>, vector<8x4xbf16>
    %c0_71 = arith.constant 0 : index
    %c68 = arith.constant 68 : index
    %113 = vector.load %arg7[%c0_71, %c68] : memref<8x96xbf16, #tpu.memory_space<vmem>>, vector<8x4xbf16>
    %cst_72 = arith.constant dense<0.000000e+00> : vector<8x8xf32>
    %114 = tpu.matmul %111, %112, %cst_72 {dimension_numbers = #tpu.dot_dimension_numbers<[1], [1], [0], [0], [0, 0, 1, 0], [], []>} : vector<8x4xbf16>, vector<8x4xbf16>, vector<8x8xf32> -> vector<8x8xf32>
    %cst_73 = arith.constant dense<0xFF800000> : vector<8xf32>
    %115 = vector.multi_reduction <maximumf>, %114, %cst_73 [1] : vector<8x8xf32> to vector<8xf32>
    %116 = vector.shape_cast %115 : vector<8xf32> to vector<8x1xf32>
    %117 = vector.broadcast %116 : vector<8x1xf32> to vector<8x8xf32>
    %118 = arith.subf %114, %117 : vector<8x8xf32>
    %119 = math.exp %118 : vector<8x8xf32>
    %cst_74 = arith.constant dense<0.000000e+00> : vector<8xf32>
    %120 = vector.multi_reduction <add>, %119, %cst_74 [1] : vector<8x8xf32> to vector<8xf32>
    %121 = vector.shape_cast %120 : vector<8xf32> to vector<8x1xf32>
    %122 = tpu.reciprocal %121 {approx = true} : vector<8x1xf32> -> vector<8x1xf32>
    %123 = vector.broadcast %122 : vector<8x1xf32> to vector<8x8xf32>
    %124 = arith.mulf %119, %123 : vector<8x8xf32>
    %125 = arith.truncf %124 : vector<8x8xf32> to vector<8x8xbf16>
    %c0_75 = arith.constant 0 : index
    %c5 = arith.constant 5 : index
    %c0_76 = arith.constant 0 : index
    %c0_77 = arith.constant 0 : index
    %126 = vector.load %arg6[%c0_75, %c5, %c0_76, %c0_77] : memref<1x8x8x8xbf16, #tpu.memory_space<vmem>>, vector<1x1x8x8xbf16>
    %127 = vector.shape_cast %126 : vector<1x1x8x8xbf16> to vector<8x8xbf16>
    %128 = vector.shape_cast %125 : vector<8x8xbf16> to vector<1x1x8x8xbf16>
    tpu.vector_store %arg6[%c0_75, %c5, %c0_76, %c0_77], %128 {strides = array<i32>} : memref<1x8x8x8xbf16, #tpu.memory_space<vmem>>, vector<1x1x8x8xbf16>,
    %cst_78 = arith.constant dense<0.000000e+00> : vector<8x4xf32>
    %129 = tpu.matmul %125, %113, %cst_78 {dimension_numbers = #tpu.dot_dimension_numbers<[1], [0], [0], [1], [0, 0, 1, 1], [], []>} : vector<8x8xbf16>, vector<8x4xbf16>, vector<8x4xf32> -> vector<8x4xf32>
    %130 = arith.truncf %129 : vector<8x4xf32> to vector<8x4xbf16>
    %c0_79 = arith.constant 0 : index
    %c20_80 = arith.constant 20 : index
    %131 = vector.load %arg8[%c0_79, %c20_80] : memref<8x32xbf16, #tpu.memory_space<vmem>>, vector<8x4xbf16>
    tpu.vector_store %arg8[%c0_79, %c20_80], %130 {strides = array<i32>} : memref<8x32xbf16, #tpu.memory_space<vmem>>, vector<8x4xbf16>,
    %c0_81 = arith.constant 0 : index
    %c72 = arith.constant 72 : index
    %132 = vector.load %arg7[%c0_81, %c72] : memref<8x96xbf16, #tpu.memory_space<vmem>>, vector<8x4xbf16>
    %c0_82 = arith.constant 0 : index
    %c76 = arith.constant 76 : index
    %133 = vector.load %arg7[%c0_82, %c76] : memref<8x96xbf16, #tpu.memory_space<vmem>>, vector<8x4xbf16>
    %c0_83 = arith.constant 0 : index
    %c80 = arith.constant 80 : index
    %134 = vector.load %arg7[%c0_83, %c80] : memref<8x96xbf16, #tpu.memory_space<vmem>>, vector<8x4xbf16>
    %cst_84 = arith.constant dense<0.000000e+00> : vector<8x8xf32>
    %135 = tpu.matmul %132, %133, %cst_84 {dimension_numbers = #tpu.dot_dimension_numbers<[1], [1], [0], [0], [0, 0, 1, 0], [], []>} : vector<8x4xbf16>, vector<8x4xbf16>, vector<8x8xf32> -> vector<8x8xf32>
    %cst_85 = arith.constant dense<0xFF800000> : vector<8xf32>
    %136 = vector.multi_reduction <maximumf>, %135, %cst_85 [1] : vector<8x8xf32> to vector<8xf32>
    %137 = vector.shape_cast %136 : vector<8xf32> to vector<8x1xf32>
    %138 = vector.broadcast %137 : vector<8x1xf32> to vector<8x8xf32>
    %139 = arith.subf %135, %138 : vector<8x8xf32>
    %140 = math.exp %139 : vector<8x8xf32>
    %cst_86 = arith.constant dense<0.000000e+00> : vector<8xf32>
    %141 = vector.multi_reduction <add>, %140, %cst_86 [1] : vector<8x8xf32> to vector<8xf32>
    %142 = vector.shape_cast %141 : vector<8xf32> to vector<8x1xf32>
    %143 = tpu.reciprocal %142 {approx = true} : vector<8x1xf32> -> vector<8x1xf32>
    %144 = vector.broadcast %143 : vector<8x1xf32> to vector<8x8xf32>
    %145 = arith.mulf %140, %144 : vector<8x8xf32>
    %146 = arith.truncf %145 : vector<8x8xf32> to vector<8x8xbf16>
    %c0_87 = arith.constant 0 : index
    %c6 = arith.constant 6 : index
    %c0_88 = arith.constant 0 : index
    %c0_89 = arith.constant 0 : index
    %147 = vector.load %arg6[%c0_87, %c6, %c0_88, %c0_89] : memref<1x8x8x8xbf16, #tpu.memory_space<vmem>>, vector<1x1x8x8xbf16>
    %148 = vector.shape_cast %147 : vector<1x1x8x8xbf16> to vector<8x8xbf16>
    %149 = vector.shape_cast %146 : vector<8x8xbf16> to vector<1x1x8x8xbf16>
    tpu.vector_store %arg6[%c0_87, %c6, %c0_88, %c0_89], %149 {strides = array<i32>} : memref<1x8x8x8xbf16, #tpu.memory_space<vmem>>, vector<1x1x8x8xbf16>,
    %cst_90 = arith.constant dense<0.000000e+00> : vector<8x4xf32>
    %150 = tpu.matmul %146, %134, %cst_90 {dimension_numbers = #tpu.dot_dimension_numbers<[1], [0], [0], [1], [0, 0, 1, 1], [], []>} : vector<8x8xbf16>, vector<8x4xbf16>, vector<8x4xf32> -> vector<8x4xf32>
    %151 = arith.truncf %150 : vector<8x4xf32> to vector<8x4xbf16>
    %c0_91 = arith.constant 0 : index
    %c24_92 = arith.constant 24 : index
    %152 = vector.load %arg8[%c0_91, %c24_92] : memref<8x32xbf16, #tpu.memory_space<vmem>>, vector<8x4xbf16>
    tpu.vector_store %arg8[%c0_91, %c24_92], %151 {strides = array<i32>} : memref<8x32xbf16, #tpu.memory_space<vmem>>, vector<8x4xbf16>,
    %c0_93 = arith.constant 0 : index
    %c84 = arith.constant 84 : index
    %153 = vector.load %arg7[%c0_93, %c84] : memref<8x96xbf16, #tpu.memory_space<vmem>>, vector<8x4xbf16>
    %c0_94 = arith.constant 0 : index
    %c88 = arith.constant 88 : index
    %154 = vector.load %arg7[%c0_94, %c88] : memref<8x96xbf16, #tpu.memory_space<vmem>>, vector<8x4xbf16>
    %c0_95 = arith.constant 0 : index
    %c92 = arith.constant 92 : index
    %155 = vector.load %arg7[%c0_95, %c92] : memref<8x96xbf16, #tpu.memory_space<vmem>>, vector<8x4xbf16>
    %cst_96 = arith.constant dense<0.000000e+00> : vector<8x8xf32>
    %156 = tpu.matmul %153, %154, %cst_96 {dimension_numbers = #tpu.dot_dimension_numbers<[1], [1], [0], [0], [0, 0, 1, 0], [], []>} : vector<8x4xbf16>, vector<8x4xbf16>, vector<8x8xf32> -> vector<8x8xf32>
    %cst_97 = arith.constant dense<0xFF800000> : vector<8xf32>
    %157 = vector.multi_reduction <maximumf>, %156, %cst_97 [1] : vector<8x8xf32> to vector<8xf32>
    %158 = vector.shape_cast %157 : vector<8xf32> to vector<8x1xf32>
    %159 = vector.broadcast %158 : vector<8x1xf32> to vector<8x8xf32>
    %160 = arith.subf %156, %159 : vector<8x8xf32>
    %161 = math.exp %160 : vector<8x8xf32>
    %cst_98 = arith.constant dense<0.000000e+00> : vector<8xf32>
    %162 = vector.multi_reduction <add>, %161, %cst_98 [1] : vector<8x8xf32> to vector<8xf32>
    %163 = vector.shape_cast %162 : vector<8xf32> to vector<8x1xf32>
    %164 = tpu.reciprocal %163 {approx = true} : vector<8x1xf32> -> vector<8x1xf32>
    %165 = vector.broadcast %164 : vector<8x1xf32> to vector<8x8xf32>
    %166 = arith.mulf %161, %165 : vector<8x8xf32>
    %167 = arith.truncf %166 : vector<8x8xf32> to vector<8x8xbf16>
    %c0_99 = arith.constant 0 : index
    %c7 = arith.constant 7 : index
    %c0_100 = arith.constant 0 : index
    %c0_101 = arith.constant 0 : index
    %168 = vector.load %arg6[%c0_99, %c7, %c0_100, %c0_101] : memref<1x8x8x8xbf16, #tpu.memory_space<vmem>>, vector<1x1x8x8xbf16>
    %169 = vector.shape_cast %168 : vector<1x1x8x8xbf16> to vector<8x8xbf16>
    %170 = vector.shape_cast %167 : vector<8x8xbf16> to vector<1x1x8x8xbf16>
    tpu.vector_store %arg6[%c0_99, %c7, %c0_100, %c0_101], %170 {strides = array<i32>} : memref<1x8x8x8xbf16, #tpu.memory_space<vmem>>, vector<1x1x8x8xbf16>,
    %cst_102 = arith.constant dense<0.000000e+00> : vector<8x4xf32>
    %171 = tpu.matmul %167, %155, %cst_102 {dimension_numbers = #tpu.dot_dimension_numbers<[1], [0], [0], [1], [0, 0, 1, 1], [], []>} : vector<8x8xbf16>, vector<8x4xbf16>, vector<8x4xf32> -> vector<8x4xf32>
    %172 = arith.truncf %171 : vector<8x4xf32> to vector<8x4xbf16>
    %c0_103 = arith.constant 0 : index
    %c28_104 = arith.constant 28 : index
    %173 = vector.load %arg8[%c0_103, %c28_104] : memref<8x32xbf16, #tpu.memory_space<vmem>>, vector<8x4xbf16>
    tpu.vector_store %arg8[%c0_103, %c28_104], %172 {strides = array<i32>} : memref<8x32xbf16, #tpu.memory_space<vmem>>, vector<8x4xbf16>,
    %c0_105 = arith.constant 0 : index
    %c0_106 = arith.constant 0 : index
    %174 = vector.load %arg8[%c0_105, %c0_106] : memref<8x32xbf16, #tpu.memory_space<vmem>>, vector<8x32xbf16>
    %c0_107 = arith.constant 0 : index
    %c0_108 = arith.constant 0 : index
    %175 = vector.load %arg3[%c0_107, %c0_108] : memref<32x32xbf16, #tpu.memory_space<vmem>>, vector<32x32xbf16>
    %cst_109 = arith.constant dense<0.000000e+00> : vector<8x32xf32>
    %176 = tpu.matmul %174, %175, %cst_109 {dimension_numbers = #tpu.dot_dimension_numbers<[1], [0], [0], [1], [0, 0, 1, 1], [], []>} : vector<8x32xbf16>, vector<32x32xbf16>, vector<8x32xf32> -> vector<8x32xf32>
    %c0_110 = arith.constant 0 : index
    %c0_111 = arith.constant 0 : index
    %177 = vector.load %arg4[%c0_110, %c0_111] : memref<1x32xf32, #tpu.memory_space<vmem>>, vector<1x32xf32>
    %178 = vector.broadcast %177 : vector<1x32xf32> to vector<8x32xf32>
    %179 = arith.addf %176, %178 : vector<8x32xf32>
    %c0_112 = arith.constant 0 : index
    %c0_113 = arith.constant 0 : index
    %c0_114 = arith.constant 0 : index
    %180 = vector.load %arg5[%c0_112, %c0_113, %c0_114] : memref<1x8x32xf32, #tpu.memory_space<vmem>>, vector<1x8x32xf32>
    %181 = vector.shape_cast %180 : vector<1x8x32xf32> to vector<8x32xf32>
    %182 = vector.shape_cast %179 : vector<8x32xf32> to vector<1x8x32xf32>
    tpu.vector_store %arg5[%c0_112, %c0_113, %c0_114], %182 {strides = array<i32>} : memref<1x8x32xf32, #tpu.memory_space<vmem>>, vector<1x8x32xf32>,
    return
  }
  func.func @transform_0(%arg0: i32) -> (i32, i32, i32) {
    %c0_i32 = arith.constant 0 : i32
    %c0_i32_0 = arith.constant 0 : i32
    %c0_i32_1 = arith.constant 0 : i32
    return %arg0, %c0_i32, %c0_i32_0 : i32, i32, i32
  }
  func.func @transform_1(%arg0: i32) -> (i32, i32) {
    %c0_i32 = arith.constant 0 : i32
    %c0_i32_0 = arith.constant 0 : i32
    %c0_i32_1 = arith.constant 0 : i32
    return %c0_i32, %c0_i32_0 : i32, i32
  }
  func.func @transform_2(%arg0: i32) -> (i32, i32) {
    %c0_i32 = arith.constant 0 : i32
    %c0_i32_0 = arith.constant 0 : i32
    %c0_i32_1 = arith.constant 0 : i32
    return %c0_i32, %c0_i32_0 : i32, i32
  }
  func.func @transform_3(%arg0: i32) -> (i32, i32) {
    %c0_i32 = arith.constant 0 : i32
    %c0_i32_0 = arith.constant 0 : i32
    %c0_i32_1 = arith.constant 0 : i32
    return %c0_i32, %c0_i32_0 : i32, i32
  }
  func.func @transform_4(%arg0: i32) -> (i32, i32, i32) {
    %c0_i32 = arith.constant 0 : i32
    %c0_i32_0 = arith.constant 0 : i32
    %c0_i32_1 = arith.constant 0 : i32
    return %arg0, %c0_i32, %c0_i32_0 : i32, i32, i32
  }
  func.func @transform_5(%arg0: i32) -> (i32, i32, i32, i32) {
    %c0_i32 = arith.constant 0 : i32
    %c0_i32_0 = arith.constant 0 : i32
    %c0_i32_1 = arith.constant 0 : i32
    %c0_i32_2 = arith.constant 0 : i32
    return %arg0, %c0_i32, %c0_i32_0, %c0_i32_1 : i32, i32, i32, i32
  }
}

</mosaic_0001>

<llo_original>
// kernel: tpu_custom_call.1
$region0: #{tpu_custom_call.1}
  #allocation0 [shape = 'u32[]', space=smem, size = 0x4, offset = 0x4, fixed_abs, tag = 'smem constant byte address 0x4 - core index']
  #allocation1 [shape = 'u32[144,128]{1,0:T(1,128)}', space=vmem, size = 0x12000, scoped, tag = 'internal scratch']
  #allocation2 [shape = 'bf16[8,96]{1,0:T(8,128)(2,1)}', space=vmem, size = 0x800, scoped, tag = 'scratch operand']
  #allocation3 [shape = 'bf16[8,32]{1,0:T(8,128)(2,1)}', space=vmem, size = 0x800, scoped, tag = 'scratch operand']
  %s0 = inlined_call_operand.hbm [shape: bf16[2,8,32], index: 0, kind: input, shape index: {}]
  %s1 = inlined_call_operand.hbm [shape: bf16[32,96], index: 1, kind: input, shape index: {}]
  %s2 = inlined_call_operand.hbm [shape: bf16[32,32], index: 2, kind: input, shape index: {}]
  %s3 = inlined_call_operand.vmem [shape: f32[1,32], index: 3, kind: input, shape index: {}]
  %s4 = inlined_call_operand.hbm [shape: f32[2,8,32], index: 4, kind: output, shape index: {0}]
  %s5 = inlined_call_operand.hbm [shape: bf16[2,8,8,8], index: 5, kind: output, shape index: {1}]
  %6 = xla_tuple %s4, %s5
  %s7 = sld [smem:[#allocation0]]
  $region69: #{tpu_custom_call.1} parent=0
    _
  %s9 = ssub.s32 1, %s7
  %s10 = scalar_select 0, %s9, %s7
  $region1: #{tpu_custom_call.1} parent=0
    #allocation4 [shape = 'u8[4096]{0}', space=vmem, size = 0x1000, scoped, tag = 'input window, operand 0']
    #allocation5 [shape = 's32[2]{0}', space=sflag, size = 0x8, scoped, tag = 'scoped memory for tpu_custom_call.1']
    #allocation6 [shape = 's32[2]{0}', space=sflag, size = 0x8, scoped, tag = 'scoped memory for tpu_custom_call.1']
    #allocation7 [shape = 'u8[8192]{0}', space=vmem, size = 0x2000, scoped, tag = 'input window, operand 1, single buffered']
    #allocation8 [shape = 's32[1]{0}', space=sflag, size = 0x4, scoped, tag = 'scoped memory for tpu_custom_call.1']
    #allocation9 [shape = 'u8[8192]{0}', space=vmem, size = 0x2000, scoped, tag = 'input window, operand 2, single buffered']
    #allocation10 [shape = 'u8[8192]{0}', space=vmem, size = 0x2000, scoped, tag = 'output window, operand 0']
    #allocation11 [shape = 'u8[32768]{0}', space=vmem, size = 0x8000, scoped, tag = 'output window, operand 1']
    #allocation12 [shape = 's32[2]{0}', space=sflag, size = 0x8, scoped, tag = 'scoped memory for tpu_custom_call.1']
    %11 = vsyncpa [#allocation5], 0
    %s12 = scalar_lea.sflag [#allocation5], 1
    %13 = vsyncpa %s12, 0
    %14 = vsyncpa [#allocation8], 0
    %15 = vsyncpa [#allocation6], 0
    %s16 = scalar_lea.sflag [#allocation6], 1
    %17 = vsyncpa %s16, 0
    %18 = vsyncpa [#allocation12], 0
    %s19 = scalar_lea.sflag [#allocation12], 1
    %20 = vsyncpa %s19, 0
    loop: start=0, step=1, limit=4
    $region2: #{tpu_custom_call.1} parent=1 // loop_pre_header
      _
    $region3: #{tpu_custom_call.1} parent=1 // loop_header
      %s22 = sphi 0, %s26
      %p23 = scmp.ge.s32.totalorder %s22, 4
      %s32 = sphi 0, %s34
      %s35 = sphi 0, %s32
      %s36 = sphi 0, %s35
      %s52 = sphi 0, %s36
      %s56 = sphi 0, %s56
      %s58 = sphi 0, %s56
      %s59 = sphi 0, %s58
      %s73 = sphi 0, %s59
      %s77 = sphi 0, %s77
      %s79 = sphi 0, %s77
      %s80 = sphi 0, %s79
      %s94 = sphi 0, %s80
      %s98 = sphi 0, %s98
      %s100 = sphi 0, %s98
      %s101 = sphi 0, %s100
      %s115 = sphi 0, %s101
      %s121 = sphi 0, %s123
      %s124 = sphi 0, %s121
      %s125 = sphi 0, %s124
      %s141 = sphi 0, %s125
      %s147 = sphi 0, %s149
      %s150 = sphi 0, %s147
      %s151 = sphi 0, %s150
      %s167 = sphi 0, %s151
    $region4: #{tpu_custom_call.1} parent=1 // loop_header_branch
      %25 = sbr.rel (%p23) target = $region8
    $region5: #{tpu_custom_call.1} parent=1 // loop_body
      %s27 = ssub.s32 %s22, 1
      %s28 = ssub.s32 %s22, 2
      %s29 = sadd.s32 %s22, 1
      %s30 = ssub.s32 %s22, %s29
      %p31 = scmp.eq.s32.totalorder %s30, 0
      %s33 = sadd.s32 %s32, 1
      %s34 = scalar_select %p31, %s32, %s33
      %p37 = pneg %p31
      %p38 = scmp.eq.s32.totalorder %s22, 1
      %p39 = por %p37, %p38
      %p40 = scmp.ne.s32.totalorder %s32, %s35
      %p41 = scmp.eq.s32.totalorder %s22, 0
      %p42 = por %p40, %p41
      %p43 = scmp.ne.s32.totalorder %s32, %s35
      %p44 = scmp.eq.s32.totalorder %s27, 1
      %p45 = por %p43, %p44
      %p46 = scmp.ne.s32.totalorder %s35, %s36
      %p47 = scmp.eq.s32.totalorder %s27, 0
      %p48 = por %p46, %p47
      %p49 = scmp.ne.s32.totalorder %s35, %s36
      %p50 = scmp.eq.s32.totalorder %s28, 1
      %p51 = por %p49, %p50
      %p53 = scmp.ne.s32.totalorder %s36, %s52
      %p54 = scmp.eq.s32.totalorder %s28, 0
      %p55 = por %p53, %p54
      %s57 = sadd.s32 %s56, 1
      %p60 = scmp.eq.s32.totalorder %s22, 1
      %p61 = scmp.ne.s32.totalorder %s56, %s58
      %p62 = scmp.eq.s32.totalorder %s22, 0
      %p63 = por %p61, %p62
      %p64 = scmp.ne.s32.totalorder %s56, %s58
      %p65 = scmp.eq.s32.totalorder %s27, 1
      %p66 = por %p64, %p65
      %p67 = scmp.ne.s32.totalorder %s58, %s59
      %p68 = scmp.eq.s32.totalorder %s27, 0
      %p69 = por %p67, %p68
      %p70 = scmp.ne.s32.totalorder %s58, %s59
      %p71 = scmp.eq.s32.totalorder %s28, 1
      %p72 = por %p70, %p71
      %p74 = scmp.ne.s32.totalorder %s59, %s73
      %p75 = scmp.eq.s32.totalorder %s28, 0
      %p76 = por %p74, %p75
      %s78 = sadd.s32 %s77, 1
      %p81 = scmp.eq.s32.totalorder %s22, 1
      %p82 = scmp.ne.s32.totalorder %s77, %s79
      %p83 = scmp.eq.s32.totalorder %s22, 0
      %p84 = por %p82, %p83
      %p85 = scmp.ne.s32.totalorder %s77, %s79
      %p86 = scmp.eq.s32.totalorder %s27, 1
      %p87 = por %p85, %p86
      %p88 = scmp.ne.s32.totalorder %s79, %s80
      %p89 = scmp.eq.s32.totalorder %s27, 0
      %p90 = por %p88, %p89
      %p91 = scmp.ne.s32.totalorder %s79, %s80
      %p92 = scmp.eq.s32.totalorder %s28, 1
      %p93 = por %p91, %p92
      %p95 = scmp.ne.s32.totalorder %s80, %s94
      %p96 = scmp.eq.s32.totalorder %s28, 0
      %p97 = por %p95, %p96
      %s99 = sadd.s32 %s98, 1
      %p102 = scmp.eq.s32.totalorder %s22, 1
      %p103 = scmp.ne.s32.totalorder %s98, %s100
      %p104 = scmp.eq.s32.totalorder %s22, 0
      %p105 = por %p103, %p104
      %p106 = scmp.ne.s32.totalorder %s98, %s100
      %p107 = scmp.eq.s32.totalorder %s27, 1
      %p108 = por %p106, %p107
      %p109 = scmp.ne.s32.totalorder %s100, %s101
      %p110 = scmp.eq.s32.totalorder %s27, 0
      %p111 = por %p109, %p110
      %p112 = scmp.ne.s32.totalorder %s100, %s101
      %p113 = scmp.eq.s32.totalorder %s28, 1
      %p114 = por %p112, %p113
      %p116 = scmp.ne.s32.totalorder %s101, %s115
      %p117 = scmp.eq.s32.totalorder %s28, 0
      %p118 = por %p116, %p117
      %s119 = ssub.s32 %s22, %s29
      %p120 = scmp.eq.s32.totalorder %s119, 0
      %s122 = sadd.s32 %s121, 1
      %s123 = scalar_select %p120, %s121, %s122
      %p126 = pneg %p120
      %p127 = scmp.eq.s32.totalorder %s22, 1
      %p128 = por %p126, %p127
      %p129 = scmp.ne.s32.totalorder %s121, %s124
      %p130 = scmp.eq.s32.totalorder %s22, 0
      %p131 = por %p129, %p130
      %p132 = scmp.ne.s32.totalorder %s121, %s124
      %p133 = scmp.eq.s32.totalorder %s27, 1
      %p134 = por %p132, %p133
      %p135 = scmp.ne.s32.totalorder %s124, %s125
      %p136 = scmp.eq.s32.totalorder %s27, 0
      %p137 = por %p135, %p136
      %p138 = scmp.ne.s32.totalorder %s124, %s125
      %p139 = scmp.eq.s32.totalorder %s28, 1
      %p140 = por %p138, %p139
      %p142 = scmp.ne.s32.totalorder %s125, %s141
      %p143 = scmp.eq.s32.totalorder %s28, 0
      %p144 = por %p142, %p143
      %s145 = ssub.s32 %s22, %s29
      %p146 = scmp.eq.s32.totalorder %s145, 0
      %s148 = sadd.s32 %s147, 1
      %s149 = scalar_select %p146, %s147, %s148
      %p152 = pneg %p146
      %p153 = scmp.eq.s32.totalorder %s22, 1
      %p154 = por %p152, %p153
      %p155 = scmp.ne.s32.totalorder %s147, %s150
      %p156 = scmp.eq.s32.totalorder %s22, 0
      %p157 = por %p155, %p156
      %p158 = scmp.ne.s32.totalorder %s147, %s150
      %p159 = scmp.eq.s32.totalorder %s27, 1
      %p160 = por %p158, %p159
      %p161 = scmp.ne.s32.totalorder %s150, %s151
      %p162 = scmp.eq.s32.totalorder %s27, 0
      %p163 = por %p161, %p162
      %p164 = scmp.ne.s32.totalorder %s150, %s151
      %p165 = scmp.eq.s32.totalorder %s28, 1
      %p166 = por %p164, %p165
      %p168 = scmp.ne.s32.totalorder %s151, %s167
      %p169 = scmp.eq.s32.totalorder %s28, 0
      %p170 = por %p168, %p169
      %p171 = scmp.le.s32.totalorder 1, %s22
      %p172 = scmp.lt.s32.totalorder %s22, 3
      %p173 = pnand %p171, %p172
      %p174 = pneg %p173
      // Predicated region
      $region9: #{tpu_custom_call.1} parent=5 // pred_check
        _
      $region10: #{tpu_custom_call.1} parent=5 // pred_check_branch
        %176 = sbr.rel (%p173) target = $region12
      $region11: #{tpu_custom_call.1} parent=5 // pred_region
        %s177 = ssub.s32 %s22, 1
        // Predicated region
        $region13: #{tpu_custom_call.1} parent=11 // pred_check
          %p178 = pneg %p69
        $region14: #{tpu_custom_call.1} parent=11 // pred_check_branch
          %180 = sbr.rel (%p178) target = $region16
        $region15: #{tpu_custom_call.1} parent=11 // pred_region
          %s182 = ssub.s32 256, 256
          %183 = vsyncadd [#allocation8], %s182
          %s184 = sshll.u32 [#allocation7], 4
          %s185 = int_to_ptr.vmem [resolvable:$true] %s184
          %190 = dma.hbm_to_vmem [thread:$0]  %s1, 256, %s185, [#allocation8], 64, 64, 4
        $region16: #{tpu_custom_call.1} parent=11 // pred_fallthru
          _
        // Predicated region
        $region17: #{tpu_custom_call.1} parent=11 // pred_check
          %p191 = pneg %p90
        $region18: #{tpu_custom_call.1} parent=11 // pred_check_branch
          %193 = sbr.rel (%p191) target = $region20
        $region19: #{tpu_custom_call.1} parent=11 // pred_region
          %s195 = ssub.s32 256, 256
          %196 = vsyncadd [#allocation8], %s195
          %s197 = sshll.u32 [#allocation9], 4
          %s198 = int_to_ptr.vmem [resolvable:$true] %s197
          %203 = dma.hbm_to_vmem [thread:$0]  %s2, 256, %s198, [#allocation8], 64, 64, 4
        $region20: #{tpu_custom_call.1} parent=11 // pred_fallthru
          _
        // Predicated region
        $region21: #{tpu_custom_call.1} parent=11 // pred_check
          %p204 = pneg %p111
        $region22: #{tpu_custom_call.1} parent=11 // pred_check_branch
          %206 = sbr.rel (%p204) target = $region24
        $region23: #{tpu_custom_call.1} parent=11 // pred_region
          _
        $region24: #{tpu_custom_call.1} parent=11 // pred_fallthru
          _
      $region12: #{tpu_custom_call.1} parent=5 // pred_fallthru
        _
      %p207 = scmp.lt.s32.totalorder %s22, 2
      // Predicated region
      $region25: #{tpu_custom_call.1} parent=5 // pred_check
        %p208 = pneg %p207
      $region26: #{tpu_custom_call.1} parent=5 // pred_check_branch
        %210 = sbr.rel (%p208) target = $region28
      $region27: #{tpu_custom_call.1} parent=5 // pred_region
        // Predicated region
        $region29: #{tpu_custom_call.1} parent=27 // pred_check
          %p211 = pneg %p42
        $region30: #{tpu_custom_call.1} parent=27 // pred_check_branch
          %213 = sbr.rel (%p211) target = $region32
        $region31: #{tpu_custom_call.1} parent=27 // pred_region
          %s214 = sand.u32 %s32, 1
          %s215 = scalar_lea.sflag [#allocation5], %s214
          %s216 = sand.u32 %s32, 1
          %s217 = smul.addr %s216, 4
          %s218 = scalar_lea.vmem [#allocation4], %s217
          %s220 = ssub.s32 64, 64
          %221 = vsyncadd %s215, %s220
          %s222 = smul.addr %s22, 64
          %s223 = scalar_lea.hbm %s0, %s222
          %s225 = sshll.u32 %s218, 4
          %s226 = int_to_ptr.vmem [resolvable:$true] %s225
          %228 = dma.hbm_to_vmem [thread:$0]  %s223, 64, %s226, %s215
        $region32: #{tpu_custom_call.1} parent=27 // pred_fallthru
          _
      $region28: #{tpu_custom_call.1} parent=5 // pred_fallthru
        _
      %p229 = scmp.le.s32.totalorder 1, %s22
      %p230 = scmp.lt.s32.totalorder %s22, 3
      %p231 = pnand %p229, %p230
      %p232 = pneg %p231
      // Predicated region
      $region33: #{tpu_custom_call.1} parent=5 // pred_check
        _
      $region34: #{tpu_custom_call.1} parent=5 // pred_check_branch
        %234 = sbr.rel (%p231) target = $region36
      $region35: #{tpu_custom_call.1} parent=5 // pred_region
        %s235 = ssub.s32 %s22, 1
        %s236 = sand.u32 %s35, 1
        %s237 = scalar_lea.sflag [#allocation5], %s236
        %s238 = sand.u32 %s35, 1
        %s239 = smul.addr %s238, 4
        %s240 = scalar_lea.vmem [#allocation4], %s239
        // Predicated region
        $region37: #{tpu_custom_call.1} parent=35 // pred_check
          %p241 = pneg %p48
        $region38: #{tpu_custom_call.1} parent=35 // pred_check_branch
          %243 = sbr.rel (%p241) target = $region40
        $region39: #{tpu_custom_call.1} parent=35 // pred_region
          %244 = dma.done %s237, 64
        $region40: #{tpu_custom_call.1} parent=35 // pred_fallthru
          _
        // Predicated region
        $region41: #{tpu_custom_call.1} parent=35 // pred_check
          %p245 = pneg %p69
        $region42: #{tpu_custom_call.1} parent=35 // pred_check_branch
          %247 = sbr.rel (%p245) target = $region44
        $region43: #{tpu_custom_call.1} parent=35 // pred_region
          %248 = dma.done [#allocation8], 256
        $region44: #{tpu_custom_call.1} parent=35 // pred_fallthru
          _
        // Predicated region
        $region45: #{tpu_custom_call.1} parent=35 // pred_check
          %p249 = pneg %p90
        $region46: #{tpu_custom_call.1} parent=35 // pred_check_branch
          %251 = sbr.rel (%p249) target = $region48
        $region47: #{tpu_custom_call.1} parent=35 // pred_region
          %252 = dma.done [#allocation8], 256
        $region48: #{tpu_custom_call.1} parent=35 // pred_fallthru
          _
        %s253 = sand.u32 %s35, 1
        %s254 = scalar_lea.sflag [#allocation5], %s253
        %s255 = sand.u32 %s35, 1
        %s256 = smul.addr %s255, 4
        %s257 = scalar_lea.vmem [#allocation4], %s256
        %p258 = pneg %p48
        %p259 = pneg %p45
        %p260 = pneg %p69
        %p261 = pneg %p66
        %p262 = pneg %p90
        %p263 = pneg %p87
        %p264 = pneg %p111
        %p265 = pneg %p108
        %p266 = pneg %p137
        %p267 = pneg %p134
        %s268 = sand.u32 %s124, 1
        %s269 = scalar_lea.sflag [#allocation6], %s268
        %s270 = sand.u32 %s124, 1
        %s271 = smul.addr %s270, 8
        %s272 = scalar_lea.vmem [#allocation10], %s271
        %p273 = pneg %p163
        %p274 = pneg %p160
        %s275 = sand.u32 %s150, 1
        %s276 = scalar_lea.sflag [#allocation12], %s275
        %s277 = sand.u32 %s150, 1
        %s278 = smul.addr %s277, 32
        %s279 = scalar_lea.vmem [#allocation11], %s278
        %v281 = vld [vmem:[%s240] sm:$0xf]
        %v282 = vld [vmem:[#allocation7] sm:$0xf]
        %v283 = vld [vmem:[#allocation7 + $0x4] sm:$0xf]
        %v284 = vld [vmem:[#allocation7 + $0x8] sm:$0xf]
        %v285 = vld [vmem:[#allocation7 + $0xc] sm:$0xf]
        %v290 = vunpack.c.l.b16 %v282
        %v291 = vunpack.c.l.b16 %v283
        %v292 = vunpack.c.l.b16 %v284
        %v293 = vunpack.c.l.b16 %v285
        %v294 = vpack.c.b16 %v291, %v290
        %v295 = vpack.c.b16 %v293, %v292
        %vm298 = vcmask 261120
        %v300 = vsel %vm298, %v281, 0
        %302 = vmatprep.subr.bf16.mxu0 0
        %303 = vmatpush1.bf16.msra.mxu0 %v294
        %304 = vmatprep.subr.bf16.mxu0 0
        %305 = vmatpush1.bf16.msra.mxu0 %v295
        %306 = vmatprep.subr.bf16.mxu0 0
        %307 = vmatpush1.bf16.msra.mxu0 0
        %308 = vmatprep.subr.bf16.mxu0 0
        %309 = vmatpush1.bf16.msra.mxu0 0
        %310 = vmatprep.subr.bf16.mxu0 0
        %311 = vmatpush1.bf16.msra.mxu0 0
        %312 = vmatprep.subr.bf16.mxu0 0
        %313 = vmatpush1.bf16.msra.mxu0 0
        %314 = vmatprep.subr.bf16.mxu0 0
        %315 = vmatpush1.bf16.msra.mxu0 0
        %316 = vmatprep.subr.bf16.mxu0 0
        %317 = vmatpush1.bf16.msra.mxu0 0
        %318 = vmatprep.subr.bf16.mxu0 0
        %319 = vmatpush1.bf16.msra.mxu0 0
        %320 = vmatprep.subr.bf16.mxu0 0
        %321 = vmatpush1.bf16.msra.mxu0 0
        %322 = vmatprep.subr.bf16.mxu0 0
        %323 = vmatpush1.bf16.msra.mxu0 0
        %324 = vmatprep.subr.bf16.mxu0 0
        %325 = vmatpush1.bf16.msra.mxu0 0
        %326 = vmatprep.subr.bf16.mxu0 0
        %327 = vmatpush1.bf16.msra.mxu0 0
        %328 = vmatprep.subr.bf16.mxu0 0
        %329 = vmatpush1.bf16.msra.mxu0 0
        %330 = vmatprep.subr.bf16.mxu0 0
        %331 = vmatpush1.bf16.msra.mxu0 0
        %332 = vmatprep.subr.bf16.mxu0 0
        %333 = vmatpush1.bf16.msra.mxu0 0
        %334 = vmatprep.mubr.bf16.mxu0 0
        %335 = vmatmul.mubr.bf16.gmra.mrb[0].mxu0 %v300
        %v336 = vpop.f32.mrb[0].mxu0
        %v337 = vadd.f32 0.0, %v336
        %v338 = vpop.f32.mrb[0].mxu0
        %v339 = vpop.f32.mrb[0].mxu0
        %v340 = vpop.f32.mrb[0].mxu0
        %341 = vdwg.mxu0
        %v342 = vpack.c.bf16 %v337, %v337
        %vm343 = vcmask 781312
        %344 = vst.msk [vmem:[#allocation2] sm:$0xf] %vm343, %v342
        %v345 = vld [vmem:[#allocation2] sm:$0xf]
        %v347 = vunpack.c.l.b16 %v345
        %v348 = vpack.c.b16 %v347, %v347
        %349 = vrot.lane.b32.xlu0 %v348, 124
        %v350 = vpop.permute.xlu0 %349
        %vm351 = vcmask 31744
        %v353 = vsel %vm351, %v345, 0
        %v356 = vsel %vm351, %v350, 0
        %358 = vmatprep.subr.bf16.mxu0 0
        %359 = vmatpush1.bf16.xpose.msra.mxu0 %v356
        %360 = vmatprep.subr.bf16.mxu0 0
        %361 = vmatpush1.bf16.xpose.msra.mxu0 0
        %362 = vmatprep.subr.bf16.mxu0 0
        %363 = vmatpush1.bf16.xpose.msra.mxu0 0
        %364 = vmatprep.subr.bf16.mxu0 0
        %365 = vmatpush1.bf16.xpose.msra.mxu0 0
        %366 = vmatprep.subr.bf16.mxu0 0
        %367 = vmatpush1.bf16.xpose.msra.mxu0 0
        %368 = vmatprep.subr.bf16.mxu0 0
        %369 = vmatpush1.bf16.xpose.msra.mxu0 0
        %370 = vmatprep.subr.bf16.mxu0 0
        %371 = vmatpush1.bf16.xpose.msra.mxu0 0
        %372 = vmatprep.subr.bf16.mxu0 0
        %373 = vmatpush1.bf16.xpose.msra.mxu0 0
        %374 = vmatprep.subr.bf16.mxu0 0
        %375 = vmatpush1.bf16.xpose.msra.mxu0 0
        %376 = vmatprep.subr.bf16.mxu0 0
        %377 = vmatpush1.bf16.xpose.msra.mxu0 0
        %378 = vmatprep.subr.bf16.mxu0 0
        %379 = vmatpush1.bf16.xpose.msra.mxu0 0
        %380 = vmatprep.subr.bf16.mxu0 0
        %381 = vmatpush1.bf16.xpose.msra.mxu0 0
        %382 = vmatprep.subr.bf16.mxu0 0
        %383 = vmatpush1.bf16.xpose.msra.mxu0 0
        %384 = vmatprep.subr.bf16.mxu0 0
        %385 = vmatpush1.bf16.xpose.msra.mxu0 0
        %386 = vmatprep.subr.bf16.mxu0 0
        %387 = vmatpush1.bf16.xpose.msra.mxu0 0
        %388 = vmatprep.subr.bf16.mxu0 0
        %389 = vmatpush1.bf16.xpose.msra.mxu0 0
        %390 = vmatprep.mubr.bf16.mxu0 0
        %391 = vmatmul.mubr.bf16.gmra.mrb[0].mxu0 %v353
        %v392 = vpop.f32.mrb[0].mxu0
        %v393 = vadd.f32 0.0, %v392
        %v394 = vpop.f32.mrb[0].mxu0
        %v395 = vpop.f32.mrb[0].mxu0
        %v396 = vpop.f32.mrb[0].mxu0
        %397 = vdwg.mxu0
        %vm398 = vcmask 64512
        %v399 = vsel %vm398, %v393, -inf
        %400 = vmax.xlane.f32.xlu0 %v399
        %v401 = vpop.xlane.xlu0 %400
        %v402 = vsub.f32 %v393, %v401
        %v403 = vmul.f32 %v402, 1.442695
        %v404 = vpow.pop %v403
        %v405 = vsel %vm398, %v404, 0.0
        %406 = vadd.xlane.f32.xlu0 %v405
        %v407 = vpop.xlane.xlu0 %406
        %v408 = vrcp.pop %v407
        %v409 = vmul.f32 %v404, %v408
        %v410 = vpack.c.bf16 %v409, %v409
        %vm411 = vcmask 60416
        %412 = vst.msk [vmem:[%s279] sm:$0xf] %vm411, %v410
        %413 = vrot.lane.b32.xlu0 %v348, 120
        %v414 = vpop.permute.xlu0 %413
        %v416 = vsel %vm398, %v410, 0
        %vm418 = vcmask 1043456
        %v420 = vsel %vm418, %v414, 0
        %422 = vmatprep.subr.bf16.mxu0 0
        %423 = vmatpush1.bf16.msra.mxu0 %v420
        %424 = vmatprep.subr.bf16.mxu0 0
        %425 = vmatpush1.bf16.msra.mxu0 0
        %426 = vmatprep.subr.bf16.mxu0 0
        %427 = vmatpush1.bf16.msra.mxu0 0
        %428 = vmatprep.subr.bf16.mxu0 0
        %429 = vmatpush1.bf16.msra.mxu0 0
        %430 = vmatprep.subr.bf16.mxu0 0
        %431 = vmatpush1.bf16.msra.mxu0 0
        %432 = vmatprep.subr.bf16.mxu0 0
        %433 = vmatpush1.bf16.msra.mxu0 0
        %434 = vmatprep.subr.bf16.mxu0 0
        %435 = vmatpush1.bf16.msra.mxu0 0
        %436 = vmatprep.subr.bf16.mxu0 0
        %437 = vmatpush1.bf16.msra.mxu0 0
        %438 = vmatprep.subr.bf16.mxu0 0
        %439 = vmatpush1.bf16.msra.mxu0 0
        %440 = vmatprep.subr.bf16.mxu0 0
        %441 = vmatpush1.bf16.msra.mxu0 0
        %442 = vmatprep.subr.bf16.mxu0 0
        %443 = vmatpush1.bf16.msra.mxu0 0
        %444 = vmatprep.subr.bf16.mxu0 0
        %445 = vmatpush1.bf16.msra.mxu0 0
        %446 = vmatprep.subr.bf16.mxu0 0
        %447 = vmatpush1.bf16.msra.mxu0 0
        %448 = vmatprep.subr.bf16.mxu0 0
        %449 = vmatpush1.bf16.msra.mxu0 0
        %450 = vmatprep.subr.bf16.mxu0 0
        %451 = vmatpush1.bf16.msra.mxu0 0
        %452 = vmatprep.subr.bf16.mxu0 0
        %453 = vmatpush1.bf16.msra.mxu0 0
        %454 = vmatprep.mubr.bf16.mxu0 0
        %455 = vmatmul.mubr.bf16.gmra.mrb[0].mxu0 %v416
        %v456 = vpop.f32.mrb[0].mxu0
        %v457 = vadd.f32 0.0, %v456
        %v458 = vpop.f32.mrb[0].mxu0
        %v459 = vpop.f32.mrb[0].mxu0
        %v460 = vpop.f32.mrb[0].mxu0
        %461 = vdwg.mxu0
        %v462 = vpack.c.bf16 %v457, %v457
        %vm463 = vcmask 27648
        %464 = vst.msk [vmem:[#allocation3] sm:$0xf] %vm463, %v462
        %v465 = vld [vmem:[#allocation2] sm:$0xf]
        %v467 = vunpack.c.l.b16 %v465
        %v468 = vpack.c.b16 %v467, %v467
        %469 = vrot.lane.b32.xlu0 %v468, 116
        %v470 = vpop.permute.xlu0 %469
        %471 = vrot.lane.b32.xlu0 %v468, 112
        %v472 = vpop.permute.xlu0 %471
        %v474 = vsel %vm351, %v470, 0
        %v477 = vsel %vm351, %v472, 0
        %479 = vmatprep.subr.bf16.mxu0 0
        %480 = vmatpush1.bf16.xpose.msra.mxu0 %v477
        %481 = vmatprep.subr.bf16.mxu0 0
        %482 = vmatpush1.bf16.xpose.msra.mxu0 0
        %483 = vmatprep.subr.bf16.mxu0 0
        %484 = vmatpush1.bf16.xpose.msra.mxu0 0
        %485 = vmatprep.subr.bf16.mxu0 0
        %486 = vmatpush1.bf16.xpose.msra.mxu0 0
        %487 = vmatprep.subr.bf16.mxu0 0
        %488 = vmatpush1.bf16.xpose.msra.mxu0 0
        %489 = vmatprep.subr.bf16.mxu0 0
        %490 = vmatpush1.bf16.xpose.msra.mxu0 0
        %491 = vmatprep.subr.bf16.mxu0 0
        %492 = vmatpush1.bf16.xpose.msra.mxu0 0
        %493 = vmatprep.subr.bf16.mxu0 0
        %494 = vmatpush1.bf16.xpose.msra.mxu0 0
        %495 = vmatprep.subr.bf16.mxu0 0
        %496 = vmatpush1.bf16.xpose.msra.mxu0 0
        %497 = vmatprep.subr.bf16.mxu0 0
        %498 = vmatpush1.bf16.xpose.msra.mxu0 0
        %499 = vmatprep.subr.bf16.mxu0 0
        %500 = vmatpush1.bf16.xpose.msra.mxu0 0
        %501 = vmatprep.subr.bf16.mxu0 0
        %502 = vmatpush1.bf16.xpose.msra.mxu0 0
        %503 = vmatprep.subr.bf16.mxu0 0
        %504 = vmatpush1.bf16.xpose.msra.mxu0 0
        %505 = vmatprep.subr.bf16.mxu0 0
        %506 = vmatpush1.bf16.xpose.msra.mxu0 0
        %507 = vmatprep.subr.bf16.mxu0 0
        %508 = vmatpush1.bf16.xpose.msra.mxu0 0
        %509 = vmatprep.subr.bf16.mxu0 0
        %510 = vmatpush1.bf16.xpose.msra.mxu0 0
        %511 = vmatprep.mubr.bf16.mxu0 0
        %512 = vmatmul.mubr.bf16.gmra.mrb[0].mxu0 %v474
        %v513 = vpop.f32.mrb[0].mxu0
        %v514 = vadd.f32 0.0, %v513
        %v515 = vpop.f32.mrb[0].mxu0
        %v516 = vpop.f32.mrb[0].mxu0
        %v517 = vpop.f32.mrb[0].mxu0
        %518 = vdwg.mxu0
        %v519 = vsel %vm398, %v514, -inf
        %520 = vmax.xlane.f32.xlu0 %v519
        %v521 = vpop.xlane.xlu0 %520
        %v522 = vsub.f32 %v514, %v521
        %v523 = vmul.f32 %v522, 1.442695
        %v524 = vpow.pop %v523
        %v525 = vsel %vm398, %v524, 0.0
        %526 = vadd.xlane.f32.xlu0 %v525
        %v527 = vpop.xlane.xlu0 %526
        %v528 = vrcp.pop %v527
        %v529 = vmul.f32 %v524, %v528
        %v530 = vpack.c.bf16 %v529, %v529
        %s531 = scalar_lea.vmem %s279, 4 [#allocation11]
        %532 = vst.msk [vmem:[%s531] sm:$0xf] %vm411, %v530
        %533 = vrot.lane.b32.xlu0 %v468, 108
        %v534 = vpop.permute.xlu0 %533
        %v536 = vsel %vm398, %v530, 0
        %v539 = vsel %vm418, %v534, 0
        %541 = vmatprep.subr.bf16.mxu0 0
        %542 = vmatpush1.bf16.msra.mxu0 %v539
        %543 = vmatprep.subr.bf16.mxu0 0
        %544 = vmatpush1.bf16.msra.mxu0 0
        %545 = vmatprep.subr.bf16.mxu0 0
        %546 = vmatpush1.bf16.msra.mxu0 0
        %547 = vmatprep.subr.bf16.mxu0 0
        %548 = vmatpush1.bf16.msra.mxu0 0
        %549 = vmatprep.subr.bf16.mxu0 0
        %550 = vmatpush1.bf16.msra.mxu0 0
        %551 = vmatprep.subr.bf16.mxu0 0
        %552 = vmatpush1.bf16.msra.mxu0 0
        %553 = vmatprep.subr.bf16.mxu0 0
        %554 = vmatpush1.bf16.msra.mxu0 0
        %555 = vmatprep.subr.bf16.mxu0 0
        %556 = vmatpush1.bf16.msra.mxu0 0
        %557 = vmatprep.subr.bf16.mxu0 0
        %558 = vmatpush1.bf16.msra.mxu0 0
        %559 = vmatprep.subr.bf16.mxu0 0
        %560 = vmatpush1.bf16.msra.mxu0 0
        %561 = vmatprep.subr.bf16.mxu0 0
        %562 = vmatpush1.bf16.msra.mxu0 0
        %563 = vmatprep.subr.bf16.mxu0 0
        %564 = vmatpush1.bf16.msra.mxu0 0
        %565 = vmatprep.subr.bf16.mxu0 0
        %566 = vmatpush1.bf16.msra.mxu0 0
        %567 = vmatprep.subr.bf16.mxu0 0
        %568 = vmatpush1.bf16.msra.mxu0 0
        %569 = vmatprep.subr.bf16.mxu0 0
        %570 = vmatpush1.bf16.msra.mxu0 0
        %571 = vmatprep.subr.bf16.mxu0 0
        %572 = vmatpush1.bf16.msra.mxu0 0
        %573 = vmatprep.mubr.bf16.mxu0 0
        %574 = vmatmul.mubr.bf16.gmra.mrb[0].mxu0 %v536
        %v575 = vpop.f32.mrb[0].mxu0
        %v576 = vadd.f32 0.0, %v575
        %v577 = vpop.f32.mrb[0].mxu0
        %v578 = vpop.f32.mrb[0].mxu0
        %v579 = vpop.f32.mrb[0].mxu0
        %580 = vdwg.mxu0
        %v581 = vpack.c.bf16 %v576, %v576
        %v583 = vunpack.c.l.b16 %v581
        %v584 = vpack.c.b16 %v583, %v583
        %585 = vrot.lane.b32.xlu0 %v584, 4
        %v586 = vpop.permute.xlu0 %585
        %vm588 = vcmask 60448
        %589 = vst.msk [vmem:[#allocation3] sm:$0xf] %vm588, %v586
        %v590 = vld [vmem:[#allocation2] sm:$0xf]
        %v592 = vunpack.c.l.b16 %v590
        %v593 = vpack.c.b16 %v592, %v592
        %594 = vrot.lane.b32.xlu0 %v593, 104
        %v595 = vpop.permute.xlu0 %594
        %596 = vrot.lane.b32.xlu0 %v593, 100
        %v597 = vpop.permute.xlu0 %596
        %v599 = vsel %vm351, %v595, 0
        %v602 = vsel %vm351, %v597, 0
        %604 = vmatprep.subr.bf16.mxu0 0
        %605 = vmatpush1.bf16.xpose.msra.mxu0 %v602
        %606 = vmatprep.subr.bf16.mxu0 0
        %607 = vmatpush1.bf16.xpose.msra.mxu0 0
        %608 = vmatprep.subr.bf16.mxu0 0
        %609 = vmatpush1.bf16.xpose.msra.mxu0 0
        %610 = vmatprep.subr.bf16.mxu0 0
        %611 = vmatpush1.bf16.xpose.msra.mxu0 0
        %612 = vmatprep.subr.bf16.mxu0 0
        %613 = vmatpush1.bf16.xpose.msra.mxu0 0
        %614 = vmatprep.subr.bf16.mxu0 0
        %615 = vmatpush1.bf16.xpose.msra.mxu0 0
        %616 = vmatprep.subr.bf16.mxu0 0
        %617 = vmatpush1.bf16.xpose.msra.mxu0 0
        %618 = vmatprep.subr.bf16.mxu0 0
        %619 = vmatpush1.bf16.xpose.msra.mxu0 0
        %620 = vmatprep.subr.bf16.mxu0 0
        %621 = vmatpush1.bf16.xpose.msra.mxu0 0
        %622 = vmatprep.subr.bf16.mxu0 0
        %623 = vmatpush1.bf16.xpose.msra.mxu0 0
        %624 = vmatprep.subr.bf16.mxu0 0
        %625 = vmatpush1.bf16.xpose.msra.mxu0 0
        %626 = vmatprep.subr.bf16.mxu0 0
        %627 = vmatpush1.bf16.xpose.msra.mxu0 0
        %628 = vmatprep.subr.bf16.mxu0 0
        %629 = vmatpush1.bf16.xpose.msra.mxu0 0
        %630 = vmatprep.subr.bf16.mxu0 0
        %631 = vmatpush1.bf16.xpose.msra.mxu0 0
        %632 = vmatprep.subr.bf16.mxu0 0
        %633 = vmatpush1.bf16.xpose.msra.mxu0 0
        %634 = vmatprep.subr.bf16.mxu0 0
        %635 = vmatpush1.bf16.xpose.msra.mxu0 0
        %636 = vmatprep.mubr.bf16.mxu0 0
        %637 = vmatmul.mubr.bf16.gmra.mrb[0].mxu0 %v599
        %v638 = vpop.f32.mrb[0].mxu0
        %v639 = vadd.f32 0.0, %v638
        %v640 = vpop.f32.mrb[0].mxu0
        %v641 = vpop.f32.mrb[0].mxu0
        %v642 = vpop.f32.mrb[0].mxu0
        %643 = vdwg.mxu0
        %v644 = vsel %vm398, %v639, -inf
        %645 = vmax.xlane.f32.xlu0 %v644
        %v646 = vpop.xlane.xlu0 %645
        %v647 = vsub.f32 %v639, %v646
        %v648 = vmul.f32 %v647, 1.442695
        %v649 = vpow.pop %v648
        %v650 = vsel %vm398, %v649, 0.0
        %651 = vadd.xlane.f32.xlu0 %v650
        %v652 = vpop.xlane.xlu0 %651
        %v653 = vrcp.pop %v652
        %v654 = vmul.f32 %v649, %v653
        %v655 = vpack.c.bf16 %v654, %v654
        %s656 = scalar_lea.vmem %s279, 8 [#allocation11]
        %657 = vst.msk [vmem:[%s656] sm:$0xf] %vm411, %v655
        %658 = vrot.lane.b32.xlu0 %v593, 96
        %v659 = vpop.permute.xlu0 %658
        %v661 = vsel %vm398, %v655, 0
        %v664 = vsel %vm418, %v659, 0
        %666 = vmatprep.subr.bf16.mxu0 0
        %667 = vmatpush1.bf16.msra.mxu0 %v664
        %668 = vmatprep.subr.bf16.mxu0 0
        %669 = vmatpush1.bf16.msra.mxu0 0
        %670 = vmatprep.subr.bf16.mxu0 0
        %671 = vmatpush1.bf16.msra.mxu0 0
        %672 = vmatprep.subr.bf16.mxu0 0
        %673 = vmatpush1.bf16.msra.mxu0 0
        %674 = vmatprep.subr.bf16.mxu0 0
        %675 = vmatpush1.bf16.msra.mxu0 0
        %676 = vmatprep.subr.bf16.mxu0 0
        %677 = vmatpush1.bf16.msra.mxu0 0
        %678 = vmatprep.subr.bf16.mxu0 0
        %679 = vmatpush1.bf16.msra.mxu0 0
        %680 = vmatprep.subr.bf16.mxu0 0
        %681 = vmatpush1.bf16.msra.mxu0 0
        %682 = vmatprep.subr.bf16.mxu0 0
        %683 = vmatpush1.bf16.msra.mxu0 0
        %684 = vmatprep.subr.bf16.mxu0 0
        %685 = vmatpush1.bf16.msra.mxu0 0
        %686 = vmatprep.subr.bf16.mxu0 0
        %687 = vmatpush1.bf16.msra.mxu0 0
        %688 = vmatprep.subr.bf16.mxu0 0
        %689 = vmatpush1.bf16.msra.mxu0 0
        %690 = vmatprep.subr.bf16.mxu0 0
        %691 = vmatpush1.bf16.msra.mxu0 0
        %692 = vmatprep.subr.bf16.mxu0 0
        %693 = vmatpush1.bf16.msra.mxu0 0
        %694 = vmatprep.subr.bf16.mxu0 0
        %695 = vmatpush1.bf16.msra.mxu0 0
        %696 = vmatprep.subr.bf16.mxu0 0
        %697 = vmatpush1.bf16.msra.mxu0 0
        %698 = vmatprep.mubr.bf16.mxu0 0
        %699 = vmatmul.mubr.bf16.gmra.mrb[0].mxu0 %v661
        %v700 = vpop.f32.mrb[0].mxu0
        %v701 = vadd.f32 0.0, %v700
        %v702 = vpop.f32.mrb[0].mxu0
        %v703 = vpop.f32.mrb[0].mxu0
        %v704 = vpop.f32.mrb[0].mxu0
        %705 = vdwg.mxu0
        %v706 = vpack.c.bf16 %v701, %v701
        %v708 = vunpack.c.l.b16 %v706
        %v709 = vpack.c.b16 %v708, %v708
        %710 = vrot.lane.b32.xlu0 %v709, 8
        %v711 = vpop.permute.xlu0 %710
        %vm713 = vcmask 93248
        %714 = vst.msk [vmem:[#allocation3] sm:$0xf] %vm713, %v711
        %v715 = vld [vmem:[#allocation2] sm:$0xf]
        %v717 = vunpack.c.l.b16 %v715
        %v718 = vpack.c.b16 %v717, %v717
        %719 = vrot.lane.b32.xlu0 %v718, 92
        %v720 = vpop.permute.xlu0 %719
        %721 = vrot.lane.b32.xlu0 %v718, 88
        %v722 = vpop.permute.xlu0 %721
        %v724 = vsel %vm351, %v720, 0
        %v727 = vsel %vm351, %v722, 0
        %729 = vmatprep.subr.bf16.mxu0 0
        %730 = vmatpush1.bf16.xpose.msra.mxu0 %v727
        %731 = vmatprep.subr.bf16.mxu0 0
        %732 = vmatpush1.bf16.xpose.msra.mxu0 0
        %733 = vmatprep.subr.bf16.mxu0 0
        %734 = vmatpush1.bf16.xpose.msra.mxu0 0
        %735 = vmatprep.subr.bf16.mxu0 0
        %736 = vmatpush1.bf16.xpose.msra.mxu0 0
        %737 = vmatprep.subr.bf16.mxu0 0
        %738 = vmatpush1.bf16.xpose.msra.mxu0 0
        %739 = vmatprep.subr.bf16.mxu0 0
        %740 = vmatpush1.bf16.xpose.msra.mxu0 0
        %741 = vmatprep.subr.bf16.mxu0 0
        %742 = vmatpush1.bf16.xpose.msra.mxu0 0
        %743 = vmatprep.subr.bf16.mxu0 0
        %744 = vmatpush1.bf16.xpose.msra.mxu0 0
        %745 = vmatprep.subr.bf16.mxu0 0
        %746 = vmatpush1.bf16.xpose.msra.mxu0 0
        %747 = vmatprep.subr.bf16.mxu0 0
        %748 = vmatpush1.bf16.xpose.msra.mxu0 0
        %749 = vmatprep.subr.bf16.mxu0 0
        %750 = vmatpush1.bf16.xpose.msra.mxu0 0
        %751 = vmatprep.subr.bf16.mxu0 0
        %752 = vmatpush1.bf16.xpose.msra.mxu0 0
        %753 = vmatprep.subr.bf16.mxu0 0
        %754 = vmatpush1.bf16.xpose.msra.mxu0 0
        %755 = vmatprep.subr.bf16.mxu0 0
        %756 = vmatpush1.bf16.xpose.msra.mxu0 0
        %757 = vmatprep.subr.bf16.mxu0 0
        %758 = vmatpush1.bf16.xpose.msra.mxu0 0
        %759 = vmatprep.subr.bf16.mxu0 0
        %760 = vmatpush1.bf16.xpose.msra.mxu0 0
        %761 = vmatprep.mubr.bf16.mxu0 0
        %762 = vmatmul.mubr.bf16.gmra.mrb[0].mxu0 %v724
        %v763 = vpop.f32.mrb[0].mxu0
        %v764 = vadd.f32 0.0, %v763
        %v765 = vpop.f32.mrb[0].mxu0
        %v766 = vpop.f32.mrb[0].mxu0
        %v767 = vpop.f32.mrb[0].mxu0
        %768 = vdwg.mxu0
        %v769 = vsel %vm398, %v764, -inf
        %770 = vmax.xlane.f32.xlu0 %v769
        %v771 = vpop.xlane.xlu0 %770
        %v772 = vsub.f32 %v764, %v771
        %v773 = vmul.f32 %v772, 1.442695
        %v774 = vpow.pop %v773
        %v775 = vsel %vm398, %v774, 0.0
        %776 = vadd.xlane.f32.xlu0 %v775
        %v777 = vpop.xlane.xlu0 %776
        %v778 = vrcp.pop %v777
        %v779 = vmul.f32 %v774, %v778
        %v780 = vpack.c.bf16 %v779, %v779
        %s781 = scalar_lea.vmem %s279, 12 [#allocation11]
        %782 = vst.msk [vmem:[%s781] sm:$0xf] %vm411, %v780
        %783 = vrot.lane.b32.xlu0 %v718, 84
        %v784 = vpop.permute.xlu0 %783
        %v786 = vsel %vm398, %v780, 0
        %v789 = vsel %vm418, %v784, 0
        %791 = vmatprep.subr.bf16.mxu0 0
        %792 = vmatpush1.bf16.msra.mxu0 %v789
        %793 = vmatprep.subr.bf16.mxu0 0
        %794 = vmatpush1.bf16.msra.mxu0 0
        %795 = vmatprep.subr.bf16.mxu0 0
        %796 = vmatpush1.bf16.msra.mxu0 0
        %797 = vmatprep.subr.bf16.mxu0 0
        %798 = vmatpush1.bf16.msra.mxu0 0
        %799 = vmatprep.subr.bf16.mxu0 0
        %800 = vmatpush1.bf16.msra.mxu0 0
        %801 = vmatprep.subr.bf16.mxu0 0
        %802 = vmatpush1.bf16.msra.mxu0 0
        %803 = vmatprep.subr.bf16.mxu0 0
        %804 = vmatpush1.bf16.msra.mxu0 0
        %805 = vmatprep.subr.bf16.mxu0 0
        %806 = vmatpush1.bf16.msra.mxu0 0
        %807 = vmatprep.subr.bf16.mxu0 0
        %808 = vmatpush1.bf16.msra.mxu0 0
        %809 = vmatprep.subr.bf16.mxu0 0
        %810 = vmatpush1.bf16.msra.mxu0 0
        %811 = vmatprep.subr.bf16.mxu0 0
        %812 = vmatpush1.bf16.msra.mxu0 0
        %813 = vmatprep.subr.bf16.mxu0 0
        %814 = vmatpush1.bf16.msra.mxu0 0
        %815 = vmatprep.subr.bf16.mxu0 0
        %816 = vmatpush1.bf16.msra.mxu0 0
        %817 = vmatprep.subr.bf16.mxu0 0
        %818 = vmatpush1.bf16.msra.mxu0 0
        %819 = vmatprep.subr.bf16.mxu0 0
        %820 = vmatpush1.bf16.msra.mxu0 0
        %821 = vmatprep.subr.bf16.mxu0 0
        %822 = vmatpush1.bf16.msra.mxu0 0
        %823 = vmatprep.mubr.bf16.mxu0 0
        %824 = vmatmul.mubr.bf16.gmra.mrb[0].mxu0 %v786
        %v825 = vpop.f32.mrb[0].mxu0
        %v826 = vadd.f32 0.0, %v825
        %v827 = vpop.f32.mrb[0].mxu0
        %v828 = vpop.f32.mrb[0].mxu0
        %v829 = vpop.f32.mrb[0].mxu0
        %830 = vdwg.mxu0
        %v831 = vpack.c.bf16 %v826, %v826
        %v833 = vunpack.c.l.b16 %v831
        %v834 = vpack.c.b16 %v833, %v833
        %835 = vrot.lane.b32.xlu0 %v834, 12
        %v836 = vpop.permute.xlu0 %835
        %vm838 = vcmask 126048
        %839 = vst.msk [vmem:[#allocation3] sm:$0xf] %vm838, %v836
        %v840 = vld [vmem:[#allocation2] sm:$0xf]
        %v842 = vunpack.c.l.b16 %v840
        %v843 = vpack.c.b16 %v842, %v842
        %844 = vrot.lane.b32.xlu0 %v843, 80
        %v845 = vpop.permute.xlu0 %844
        %846 = vrot.lane.b32.xlu0 %v843, 76
        %v847 = vpop.permute.xlu0 %846
        %v849 = vsel %vm351, %v845, 0
        %v852 = vsel %vm351, %v847, 0
        %854 = vmatprep.subr.bf16.mxu0 0
        %855 = vmatpush1.bf16.xpose.msra.mxu0 %v852
        %856 = vmatprep.subr.bf16.mxu0 0
        %857 = vmatpush1.bf16.xpose.msra.mxu0 0
        %858 = vmatprep.subr.bf16.mxu0 0
        %859 = vmatpush1.bf16.xpose.msra.mxu0 0
        %860 = vmatprep.subr.bf16.mxu0 0
        %861 = vmatpush1.bf16.xpose.msra.mxu0 0
        %862 = vmatprep.subr.bf16.mxu0 0
        %863 = vmatpush1.bf16.xpose.msra.mxu0 0
        %864 = vmatprep.subr.bf16.mxu0 0
        %865 = vmatpush1.bf16.xpose.msra.mxu0 0
        %866 = vmatprep.subr.bf16.mxu0 0
        %867 = vmatpush1.bf16.xpose.msra.mxu0 0
        %868 = vmatprep.subr.bf16.mxu0 0
        %869 = vmatpush1.bf16.xpose.msra.mxu0 0
        %870 = vmatprep.subr.bf16.mxu0 0
        %871 = vmatpush1.bf16.xpose.msra.mxu0 0
        %872 = vmatprep.subr.bf16.mxu0 0
        %873 = vmatpush1.bf16.xpose.msra.mxu0 0
        %874 = vmatprep.subr.bf16.mxu0 0
        %875 = vmatpush1.bf16.xpose.msra.mxu0 0
        %876 = vmatprep.subr.bf16.mxu0 0
        %877 = vmatpush1.bf16.xpose.msra.mxu0 0
        %878 = vmatprep.subr.bf16.mxu0 0
        %879 = vmatpush1.bf16.xpose.msra.mxu0 0
        %880 = vmatprep.subr.bf16.mxu0 0
        %881 = vmatpush1.bf16.xpose.msra.mxu0 0
        %882 = vmatprep.subr.bf16.mxu0 0
        %883 = vmatpush1.bf16.xpose.msra.mxu0 0
        %884 = vmatprep.subr.bf16.mxu0 0
        %885 = vmatpush1.bf16.xpose.msra.mxu0 0
        %886 = vmatprep.mubr.bf16.mxu0 0
        %887 = vmatmul.mubr.bf16.gmra.mrb[0].mxu0 %v849
        %v888 = vpop.f32.mrb[0].mxu0
        %v889 = vadd.f32 0.0, %v888
        %v890 = vpop.f32.mrb[0].mxu0
        %v891 = vpop.f32.mrb[0].mxu0
        %v892 = vpop.f32.mrb[0].mxu0
        %893 = vdwg.mxu0
        %v894 = vsel %vm398, %v889, -inf
        %895 = vmax.xlane.f32.xlu0 %v894
        %v896 = vpop.xlane.xlu0 %895
        %v897 = vsub.f32 %v889, %v896
        %v898 = vmul.f32 %v897, 1.442695
        %v899 = vpow.pop %v898
        %v900 = vsel %vm398, %v899, 0.0
        %901 = vadd.xlane.f32.xlu0 %v900
        %v902 = vpop.xlane.xlu0 %901
        %v903 = vrcp.pop %v902
        %v904 = vmul.f32 %v899, %v903
        %v905 = vpack.c.bf16 %v904, %v904
        %s906 = scalar_lea.vmem %s279, 16 [#allocation11]
        %907 = vst.msk [vmem:[%s906] sm:$0xf] %vm411, %v905
        %908 = vrot.lane.b32.xlu0 %v843, 72
        %v909 = vpop.permute.xlu0 %908
        %v911 = vsel %vm398, %v905, 0
        %v914 = vsel %vm418, %v909, 0
        %916 = vmatprep.subr.bf16.mxu0 0
        %917 = vmatpush1.bf16.msra.mxu0 %v914
        %918 = vmatprep.subr.bf16.mxu0 0
        %919 = vmatpush1.bf16.msra.mxu0 0
        %920 = vmatprep.subr.bf16.mxu0 0
        %921 = vmatpush1.bf16.msra.mxu0 0
        %922 = vmatprep.subr.bf16.mxu0 0
        %923 = vmatpush1.bf16.msra.mxu0 0
        %924 = vmatprep.subr.bf16.mxu0 0
        %925 = vmatpush1.bf16.msra.mxu0 0
        %926 = vmatprep.subr.bf16.mxu0 0
        %927 = vmatpush1.bf16.msra.mxu0 0
        %928 = vmatprep.subr.bf16.mxu0 0
        %929 = vmatpush1.bf16.msra.mxu0 0
        %930 = vmatprep.subr.bf16.mxu0 0
        %931 = vmatpush1.bf16.msra.mxu0 0
        %932 = vmatprep.subr.bf16.mxu0 0
        %933 = vmatpush1.bf16.msra.mxu0 0
        %934 = vmatprep.subr.bf16.mxu0 0
        %935 = vmatpush1.bf16.msra.mxu0 0
        %936 = vmatprep.subr.bf16.mxu0 0
        %937 = vmatpush1.bf16.msra.mxu0 0
        %938 = vmatprep.subr.bf16.mxu0 0
        %939 = vmatpush1.bf16.msra.mxu0 0
        %940 = vmatprep.subr.bf16.mxu0 0
        %941 = vmatpush1.bf16.msra.mxu0 0
        %942 = vmatprep.subr.bf16.mxu0 0
        %943 = vmatpush1.bf16.msra.mxu0 0
        %944 = vmatprep.subr.bf16.mxu0 0
        %945 = vmatpush1.bf16.msra.mxu0 0
        %946 = vmatprep.subr.bf16.mxu0 0
        %947 = vmatpush1.bf16.msra.mxu0 0
        %948 = vmatprep.mubr.bf16.mxu0 0
        %949 = vmatmul.mubr.bf16.gmra.mrb[0].mxu0 %v911
        %v950 = vpop.f32.mrb[0].mxu0
        %v951 = vadd.f32 0.0, %v950
        %v952 = vpop.f32.mrb[0].mxu0
        %v953 = vpop.f32.mrb[0].mxu0
        %v954 = vpop.f32.mrb[0].mxu0
        %955 = vdwg.mxu0
        %v956 = vpack.c.bf16 %v951, %v951
        %v958 = vunpack.c.l.b16 %v956
        %v959 = vpack.c.b16 %v958, %v958
        %960 = vrot.lane.b32.xlu0 %v959, 16
        %v961 = vpop.permute.xlu0 %960
        %vm963 = vcmask 158848
        %964 = vst.msk [vmem:[#allocation3] sm:$0xf] %vm963, %v961
        %v965 = vld [vmem:[#allocation2] sm:$0xf]
        %v967 = vunpack.c.l.b16 %v965
        %v968 = vpack.c.b16 %v967, %v967
        %969 = vrot.lane.b32.xlu0 %v968, 68
        %v970 = vpop.permute.xlu0 %969
        %971 = vrot.lane.b32.xlu0 %v968, 64
        %v972 = vpop.permute.xlu0 %971
        %v974 = vsel %vm351, %v970, 0
        %v977 = vsel %vm351, %v972, 0
        %979 = vmatprep.subr.bf16.mxu0 0
        %980 = vmatpush1.bf16.xpose.msra.mxu0 %v977
        %981 = vmatprep.subr.bf16.mxu0 0
        %982 = vmatpush1.bf16.xpose.msra.mxu0 0
        %983 = vmatprep.subr.bf16.mxu0 0
        %984 = vmatpush1.bf16.xpose.msra.mxu0 0
        %985 = vmatprep.subr.bf16.mxu0 0
        %986 = vmatpush1.bf16.xpose.msra.mxu0 0
        %987 = vmatprep.subr.bf16.mxu0 0
        %988 = vmatpush1.bf16.xpose.msra.mxu0 0
        %989 = vmatprep.subr.bf16.mxu0 0
        %990 = vmatpush1.bf16.xpose.msra.mxu0 0
        %991 = vmatprep.subr.bf16.mxu0 0
        %992 = vmatpush1.bf16.xpose.msra.mxu0 0
        %993 = vmatprep.subr.bf16.mxu0 0
        %994 = vmatpush1.bf16.xpose.msra.mxu0 0
        %995 = vmatprep.subr.bf16.mxu0 0
        %996 = vmatpush1.bf16.xpose.msra.mxu0 0
        %997 = vmatprep.subr.bf16.mxu0 0
        %998 = vmatpush1.bf16.xpose.msra.mxu0 0
        %999 = vmatprep.subr.bf16.mxu0 0
        %1000 = vmatpush1.bf16.xpose.msra.mxu0 0
        %1001 = vmatprep.subr.bf16.mxu0 0
        %1002 = vmatpush1.bf16.xpose.msra.mxu0 0
        %1003 = vmatprep.subr.bf16.mxu0 0
        %1004 = vmatpush1.bf16.xpose.msra.mxu0 0
        %1005 = vmatprep.subr.bf16.mxu0 0
        %1006 = vmatpush1.bf16.xpose.msra.mxu0 0
        %1007 = vmatprep.subr.bf16.mxu0 0
        %1008 = vmatpush1.bf16.xpose.msra.mxu0 0
        %1009 = vmatprep.subr.bf16.mxu0 0
        %1010 = vmatpush1.bf16.xpose.msra.mxu0 0
        %1011 = vmatprep.mubr.bf16.mxu0 0
        %1012 = vmatmul.mubr.bf16.gmra.mrb[0].mxu0 %v974
        %v1013 = vpop.f32.mrb[0].mxu0
        %v1014 = vadd.f32 0.0, %v1013
        %v1015 = vpop.f32.mrb[0].mxu0
        %v1016 = vpop.f32.mrb[0].mxu0
        %v1017 = vpop.f32.mrb[0].mxu0
        %1018 = vdwg.mxu0
        %v1019 = vsel %vm398, %v1014, -inf
        %1020 = vmax.xlane.f32.xlu0 %v1019
        %v1021 = vpop.xlane.xlu0 %1020
        %v1022 = vsub.f32 %v1014, %v1021
        %v1023 = vmul.f32 %v1022, 1.442695
        %v1024 = vpow.pop %v1023
        %v1025 = vsel %vm398, %v1024, 0.0
        %1026 = vadd.xlane.f32.xlu0 %v1025
        %v1027 = vpop.xlane.xlu0 %1026
        %v1028 = vrcp.pop %v1027
        %v1029 = vmul.f32 %v1024, %v1028
        %v1030 = vpack.c.bf16 %v1029, %v1029
        %s1031 = scalar_lea.vmem %s279, 20 [#allocation11]
        %1032 = vst.msk [vmem:[%s1031] sm:$0xf] %vm411, %v1030
        %1033 = vrot.lane.b32.xlu0 %v968, 60
        %v1034 = vpop.permute.xlu0 %1033
        %v1036 = vsel %vm398, %v1030, 0
        %v1039 = vsel %vm418, %v1034, 0
        %1041 = vmatprep.subr.bf16.mxu0 0
        %1042 = vmatpush1.bf16.msra.mxu0 %v1039
        %1043 = vmatprep.subr.bf16.mxu0 0
        %1044 = vmatpush1.bf16.msra.mxu0 0
        %1045 = vmatprep.subr.bf16.mxu0 0
        %1046 = vmatpush1.bf16.msra.mxu0 0
        %1047 = vmatprep.subr.bf16.mxu0 0
        %1048 = vmatpush1.bf16.msra.mxu0 0
        %1049 = vmatprep.subr.bf16.mxu0 0
        %1050 = vmatpush1.bf16.msra.mxu0 0
        %1051 = vmatprep.subr.bf16.mxu0 0
        %1052 = vmatpush1.bf16.msra.mxu0 0
        %1053 = vmatprep.subr.bf16.mxu0 0
        %1054 = vmatpush1.bf16.msra.mxu0 0
        %1055 = vmatprep.subr.bf16.mxu0 0
        %1056 = vmatpush1.bf16.msra.mxu0 0
        %1057 = vmatprep.subr.bf16.mxu0 0
        %1058 = vmatpush1.bf16.msra.mxu0 0
        %1059 = vmatprep.subr.bf16.mxu0 0
        %1060 = vmatpush1.bf16.msra.mxu0 0
        %1061 = vmatprep.subr.bf16.mxu0 0
        %1062 = vmatpush1.bf16.msra.mxu0 0
        %1063 = vmatprep.subr.bf16.mxu0 0
        %1064 = vmatpush1.bf16.msra.mxu0 0
        %1065 = vmatprep.subr.bf16.mxu0 0
        %1066 = vmatpush1.bf16.msra.mxu0 0
        %1067 = vmatprep.subr.bf16.mxu0 0
        %1068 = vmatpush1.bf16.msra.mxu0 0
        %1069 = vmatprep.subr.bf16.mxu0 0
        %1070 = vmatpush1.bf16.msra.mxu0 0
        %1071 = vmatprep.subr.bf16.mxu0 0
        %1072 = vmatpush1.bf16.msra.mxu0 0
        %1073 = vmatprep.mubr.bf16.mxu0 0
        %1074 = vmatmul.mubr.bf16.gmra.mrb[0].mxu0 %v1036
        %v1075 = vpop.f32.mrb[0].mxu0
        %v1076 = vadd.f32 0.0, %v1075
        %v1077 = vpop.f32.mrb[0].mxu0
        %v1078 = vpop.f32.mrb[0].mxu0
        %v1079 = vpop.f32.mrb[0].mxu0
        %1080 = vdwg.mxu0
        %v1081 = vpack.c.bf16 %v1076, %v1076
        %v1083 = vunpack.c.l.b16 %v1081
        %v1084 = vpack.c.b16 %v1083, %v1083
        %1085 = vrot.lane.b32.xlu0 %v1084, 20
        %v1086 = vpop.permute.xlu0 %1085
        %vm1088 = vcmask 191648
        %1089 = vst.msk [vmem:[#allocation3] sm:$0xf] %vm1088, %v1086
        %v1090 = vld [vmem:[#allocation2] sm:$0xf]
        %v1092 = vunpack.c.l.b16 %v1090
        %v1093 = vpack.c.b16 %v1092, %v1092
        %1094 = vrot.lane.b32.xlu0 %v1093, 56
        %v1095 = vpop.permute.xlu0 %1094
        %1096 = vrot.lane.b32.xlu0 %v1093, 52
        %v1097 = vpop.permute.xlu0 %1096
        %v1099 = vsel %vm351, %v1095, 0
        %v1102 = vsel %vm351, %v1097, 0
        %1104 = vmatprep.subr.bf16.mxu0 0
        %1105 = vmatpush1.bf16.xpose.msra.mxu0 %v1102
        %1106 = vmatprep.subr.bf16.mxu0 0
        %1107 = vmatpush1.bf16.xpose.msra.mxu0 0
        %1108 = vmatprep.subr.bf16.mxu0 0
        %1109 = vmatpush1.bf16.xpose.msra.mxu0 0
        %1110 = vmatprep.subr.bf16.mxu0 0
        %1111 = vmatpush1.bf16.xpose.msra.mxu0 0
        %1112 = vmatprep.subr.bf16.mxu0 0
        %1113 = vmatpush1.bf16.xpose.msra.mxu0 0
        %1114 = vmatprep.subr.bf16.mxu0 0
        %1115 = vmatpush1.bf16.xpose.msra.mxu0 0
        %1116 = vmatprep.subr.bf16.mxu0 0
        %1117 = vmatpush1.bf16.xpose.msra.mxu0 0
        %1118 = vmatprep.subr.bf16.mxu0 0
        %1119 = vmatpush1.bf16.xpose.msra.mxu0 0
        %1120 = vmatprep.subr.bf16.mxu0 0
        %1121 = vmatpush1.bf16.xpose.msra.mxu0 0
        %1122 = vmatprep.subr.bf16.mxu0 0
        %1123 = vmatpush1.bf16.xpose.msra.mxu0 0
        %1124 = vmatprep.subr.bf16.mxu0 0
        %1125 = vmatpush1.bf16.xpose.msra.mxu0 0
        %1126 = vmatprep.subr.bf16.mxu0 0
        %1127 = vmatpush1.bf16.xpose.msra.mxu0 0
        %1128 = vmatprep.subr.bf16.mxu0 0
        %1129 = vmatpush1.bf16.xpose.msra.mxu0 0
        %1130 = vmatprep.subr.bf16.mxu0 0
        %1131 = vmatpush1.bf16.xpose.msra.mxu0 0
        %1132 = vmatprep.subr.bf16.mxu0 0
        %1133 = vmatpush1.bf16.xpose.msra.mxu0 0
        %1134 = vmatprep.subr.bf16.mxu0 0
        %1135 = vmatpush1.bf16.xpose.msra.mxu0 0
        %1136 = vmatprep.mubr.bf16.mxu0 0
        %1137 = vmatmul.mubr.bf16.gmra.mrb[0].mxu0 %v1099
        %v1138 = vpop.f32.mrb[0].mxu0
        %v1139 = vadd.f32 0.0, %v1138
        %v1140 = vpop.f32.mrb[0].mxu0
        %v1141 = vpop.f32.mrb[0].mxu0
        %v1142 = vpop.f32.mrb[0].mxu0
        %1143 = vdwg.mxu0
        %v1144 = vsel %vm398, %v1139, -inf
        %1145 = vmax.xlane.f32.xlu0 %v1144
        %v1146 = vpop.xlane.xlu0 %1145
        %v1147 = vsub.f32 %v1139, %v1146
        %v1148 = vmul.f32 %v1147, 1.442695
        %v1149 = vpow.pop %v1148
        %v1150 = vsel %vm398, %v1149, 0.0
        %1151 = vadd.xlane.f32.xlu0 %v1150
        %v1152 = vpop.xlane.xlu0 %1151
        %v1153 = vrcp.pop %v1152
        %v1154 = vmul.f32 %v1149, %v1153
        %v1155 = vpack.c.bf16 %v1154, %v1154
        %s1156 = scalar_lea.vmem %s279, 24 [#allocation11]
        %1157 = vst.msk [vmem:[%s1156] sm:$0xf] %vm411, %v1155
        %1158 = vrot.lane.b32.xlu0 %v1093, 48
        %v1159 = vpop.permute.xlu0 %1158
        %v1161 = vsel %vm398, %v1155, 0
        %v1164 = vsel %vm418, %v1159, 0
        %1166 = vmatprep.subr.bf16.mxu0 0
        %1167 = vmatpush1.bf16.msra.mxu0 %v1164
        %1168 = vmatprep.subr.bf16.mxu0 0
        %1169 = vmatpush1.bf16.msra.mxu0 0
        %1170 = vmatprep.subr.bf16.mxu0 0
        %1171 = vmatpush1.bf16.msra.mxu0 0
        %1172 = vmatprep.subr.bf16.mxu0 0
        %1173 = vmatpush1.bf16.msra.mxu0 0
        %1174 = vmatprep.subr.bf16.mxu0 0
        %1175 = vmatpush1.bf16.msra.mxu0 0
        %1176 = vmatprep.subr.bf16.mxu0 0
        %1177 = vmatpush1.bf16.msra.mxu0 0
        %1178 = vmatprep.subr.bf16.mxu0 0
        %1179 = vmatpush1.bf16.msra.mxu0 0
        %1180 = vmatprep.subr.bf16.mxu0 0
        %1181 = vmatpush1.bf16.msra.mxu0 0
        %1182 = vmatprep.subr.bf16.mxu0 0
        %1183 = vmatpush1.bf16.msra.mxu0 0
        %1184 = vmatprep.subr.bf16.mxu0 0
        %1185 = vmatpush1.bf16.msra.mxu0 0
        %1186 = vmatprep.subr.bf16.mxu0 0
        %1187 = vmatpush1.bf16.msra.mxu0 0
        %1188 = vmatprep.subr.bf16.mxu0 0
        %1189 = vmatpush1.bf16.msra.mxu0 0
        %1190 = vmatprep.subr.bf16.mxu0 0
        %1191 = vmatpush1.bf16.msra.mxu0 0
        %1192 = vmatprep.subr.bf16.mxu0 0
        %1193 = vmatpush1.bf16.msra.mxu0 0
        %1194 = vmatprep.subr.bf16.mxu0 0
        %1195 = vmatpush1.bf16.msra.mxu0 0
        %1196 = vmatprep.subr.bf16.mxu0 0
        %1197 = vmatpush1.bf16.msra.mxu0 0
        %1198 = vmatprep.mubr.bf16.mxu0 0
        %1199 = vmatmul.mubr.bf16.gmra.mrb[0].mxu0 %v1161
        %v1200 = vpop.f32.mrb[0].mxu0
        %v1201 = vadd.f32 0.0, %v1200
        %v1202 = vpop.f32.mrb[0].mxu0
        %v1203 = vpop.f32.mrb[0].mxu0
        %v1204 = vpop.f32.mrb[0].mxu0
        %1205 = vdwg.mxu0
        %v1206 = vpack.c.bf16 %v1201, %v1201
        %v1208 = vunpack.c.l.b16 %v1206
        %v1209 = vpack.c.b16 %v1208, %v1208
        %1210 = vrot.lane.b32.xlu0 %v1209, 24
        %v1211 = vpop.permute.xlu0 %1210
        %vm1213 = vcmask 224448
        %1214 = vst.msk [vmem:[#allocation3] sm:$0xf] %vm1213, %v1211
        %v1215 = vld [vmem:[#allocation2] sm:$0xf]
        %v1217 = vunpack.c.l.b16 %v1215
        %v1218 = vpack.c.b16 %v1217, %v1217
        %1219 = vrot.lane.b32.xlu0 %v1218, 44
        %v1220 = vpop.permute.xlu0 %1219
        %1221 = vrot.lane.b32.xlu0 %v1218, 40
        %v1222 = vpop.permute.xlu0 %1221
        %v1224 = vsel %vm351, %v1220, 0
        %v1227 = vsel %vm351, %v1222, 0
        %1229 = vmatprep.subr.bf16.mxu0 0
        %1230 = vmatpush1.bf16.xpose.msra.mxu0 %v1227
        %1231 = vmatprep.subr.bf16.mxu0 0
        %1232 = vmatpush1.bf16.xpose.msra.mxu0 0
        %1233 = vmatprep.subr.bf16.mxu0 0
        %1234 = vmatpush1.bf16.xpose.msra.mxu0 0
        %1235 = vmatprep.subr.bf16.mxu0 0
        %1236 = vmatpush1.bf16.xpose.msra.mxu0 0
        %1237 = vmatprep.subr.bf16.mxu0 0
        %1238 = vmatpush1.bf16.xpose.msra.mxu0 0
        %1239 = vmatprep.subr.bf16.mxu0 0
        %1240 = vmatpush1.bf16.xpose.msra.mxu0 0
        %1241 = vmatprep.subr.bf16.mxu0 0
        %1242 = vmatpush1.bf16.xpose.msra.mxu0 0
        %1243 = vmatprep.subr.bf16.mxu0 0
        %1244 = vmatpush1.bf16.xpose.msra.mxu0 0
        %1245 = vmatprep.subr.bf16.mxu0 0
        %1246 = vmatpush1.bf16.xpose.msra.mxu0 0
        %1247 = vmatprep.subr.bf16.mxu0 0
        %1248 = vmatpush1.bf16.xpose.msra.mxu0 0
        %1249 = vmatprep.subr.bf16.mxu0 0
        %1250 = vmatpush1.bf16.xpose.msra.mxu0 0
        %1251 = vmatprep.subr.bf16.mxu0 0
        %1252 = vmatpush1.bf16.xpose.msra.mxu0 0
        %1253 = vmatprep.subr.bf16.mxu0 0
        %1254 = vmatpush1.bf16.xpose.msra.mxu0 0
        %1255 = vmatprep.subr.bf16.mxu0 0
        %1256 = vmatpush1.bf16.xpose.msra.mxu0 0
        %1257 = vmatprep.subr.bf16.mxu0 0
        %1258 = vmatpush1.bf16.xpose.msra.mxu0 0
        %1259 = vmatprep.subr.bf16.mxu0 0
        %1260 = vmatpush1.bf16.xpose.msra.mxu0 0
        %1261 = vmatprep.mubr.bf16.mxu0 0
        %1262 = vmatmul.mubr.bf16.gmra.mrb[0].mxu0 %v1224
        %v1263 = vpop.f32.mrb[0].mxu0
        %v1264 = vadd.f32 0.0, %v1263
        %v1265 = vpop.f32.mrb[0].mxu0
        %v1266 = vpop.f32.mrb[0].mxu0
        %v1267 = vpop.f32.mrb[0].mxu0
        %1268 = vdwg.mxu0
        %v1269 = vsel %vm398, %v1264, -inf
        %1270 = vmax.xlane.f32.xlu0 %v1269
        %v1271 = vpop.xlane.xlu0 %1270
        %v1272 = vsub.f32 %v1264, %v1271
        %v1273 = vmul.f32 %v1272, 1.442695
        %v1274 = vpow.pop %v1273
        %v1275 = vsel %vm398, %v1274, 0.0
        %1276 = vadd.xlane.f32.xlu0 %v1275
        %v1277 = vpop.xlane.xlu0 %1276
        %v1278 = vrcp.pop %v1277
        %v1279 = vmul.f32 %v1274, %v1278
        %v1280 = vpack.c.bf16 %v1279, %v1279
        %s1281 = scalar_lea.vmem %s279, 28 [#allocation11]
        %1282 = vst.msk [vmem:[%s1281] sm:$0xf] %vm411, %v1280
        %1283 = vrot.lane.b32.xlu0 %v1218, 36
        %v1284 = vpop.permute.xlu0 %1283
        %v1286 = vsel %vm398, %v1280, 0
        %v1289 = vsel %vm418, %v1284, 0
        %1291 = vmatprep.subr.bf16.mxu0 0
        %1292 = vmatpush1.bf16.msra.mxu0 %v1289
        %1293 = vmatprep.subr.bf16.mxu0 0
        %1294 = vmatpush1.bf16.msra.mxu0 0
        %1295 = vmatprep.subr.bf16.mxu0 0
        %1296 = vmatpush1.bf16.msra.mxu0 0
        %1297 = vmatprep.subr.bf16.mxu0 0
        %1298 = vmatpush1.bf16.msra.mxu0 0
        %1299 = vmatprep.subr.bf16.mxu0 0
        %1300 = vmatpush1.bf16.msra.mxu0 0
        %1301 = vmatprep.subr.bf16.mxu0 0
        %1302 = vmatpush1.bf16.msra.mxu0 0
        %1303 = vmatprep.subr.bf16.mxu0 0
        %1304 = vmatpush1.bf16.msra.mxu0 0
        %1305 = vmatprep.subr.bf16.mxu0 0
        %1306 = vmatpush1.bf16.msra.mxu0 0
        %1307 = vmatprep.subr.bf16.mxu0 0
        %1308 = vmatpush1.bf16.msra.mxu0 0
        %1309 = vmatprep.subr.bf16.mxu0 0
        %1310 = vmatpush1.bf16.msra.mxu0 0
        %1311 = vmatprep.subr.bf16.mxu0 0
        %1312 = vmatpush1.bf16.msra.mxu0 0
        %1313 = vmatprep.subr.bf16.mxu0 0
        %1314 = vmatpush1.bf16.msra.mxu0 0
        %1315 = vmatprep.subr.bf16.mxu0 0
        %1316 = vmatpush1.bf16.msra.mxu0 0
        %1317 = vmatprep.subr.bf16.mxu0 0
        %1318 = vmatpush1.bf16.msra.mxu0 0
        %1319 = vmatprep.subr.bf16.mxu0 0
        %1320 = vmatpush1.bf16.msra.mxu0 0
        %1321 = vmatprep.subr.bf16.mxu0 0
        %1322 = vmatpush1.bf16.msra.mxu0 0
        %1323 = vmatprep.mubr.bf16.mxu0 0
        %1324 = vmatmul.mubr.bf16.gmra.mrb[0].mxu0 %v1286
        %v1325 = vpop.f32.mrb[0].mxu0
        %v1326 = vadd.f32 0.0, %v1325
        %v1327 = vpop.f32.mrb[0].mxu0
        %v1328 = vpop.f32.mrb[0].mxu0
        %v1329 = vpop.f32.mrb[0].mxu0
        %1330 = vdwg.mxu0
        %v1331 = vpack.c.bf16 %v1326, %v1326
        %v1333 = vunpack.c.l.b16 %v1331
        %v1334 = vpack.c.b16 %v1333, %v1333
        %1335 = vrot.lane.b32.xlu0 %v1334, 28
        %v1336 = vpop.permute.xlu0 %1335
        %vm1338 = vcmask 257248
        %1339 = vst.msk [vmem:[#allocation3] sm:$0xf] %vm1338, %v1336
        %v1340 = vld [vmem:[#allocation3] sm:$0xf]
        %v1341 = vld [vmem:[#allocation9] sm:$0xf]
        %v1342 = vld [vmem:[#allocation9 + $0x4] sm:$0xf]
        %v1343 = vld [vmem:[#allocation9 + $0x8] sm:$0xf]
        %v1344 = vld [vmem:[#allocation9 + $0xc] sm:$0xf]
        %v1345 = vld [vmem:[%s3] sm:$0x1]
        %v1347 = vlaneseq
        %v1348 = vshrl.u32 %v1347, 7
        %v1349 = vsub.s32 0, %v1348
        %v1350 = vrot.slane %v1345, %v1349
        %v1356 = vunpack.c.l.b16 %v1341
        %v1357 = vunpack.c.l.b16 %v1342
        %v1358 = vunpack.c.l.b16 %v1343
        %v1359 = vunpack.c.l.b16 %v1344
        %v1360 = vpack.c.b16 %v1357, %v1356
        %v1361 = vpack.c.b16 %v1359, %v1358
        %v1365 = vsel %vm298, %v1340, 0
        %1367 = vmatprep.subr.bf16.mxu0 0
        %1368 = vmatpush1.bf16.msra.mxu0 %v1360
        %1369 = vmatprep.subr.bf16.mxu0 0
        %1370 = vmatpush1.bf16.msra.mxu0 %v1361
        %1371 = vmatprep.subr.bf16.mxu0 0
        %1372 = vmatpush1.bf16.msra.mxu0 0
        %1373 = vmatprep.subr.bf16.mxu0 0
        %1374 = vmatpush1.bf16.msra.mxu0 0
        %1375 = vmatprep.subr.bf16.mxu0 0
        %1376 = vmatpush1.bf16.msra.mxu0 0
        %1377 = vmatprep.subr.bf16.mxu0 0
        %1378 = vmatpush1.bf16.msra.mxu0 0
        %1379 = vmatprep.subr.bf16.mxu0 0
        %1380 = vmatpush1.bf16.msra.mxu0 0
        %1381 = vmatprep.subr.bf16.mxu0 0
        %1382 = vmatpush1.bf16.msra.mxu0 0
        %1383 = vmatprep.subr.bf16.mxu0 0
        %1384 = vmatpush1.bf16.msra.mxu0 0
        %1385 = vmatprep.subr.bf16.mxu0 0
        %1386 = vmatpush1.bf16.msra.mxu0 0
        %1387 = vmatprep.subr.bf16.mxu0 0
        %1388 = vmatpush1.bf16.msra.mxu0 0
        %1389 = vmatprep.subr.bf16.mxu0 0
        %1390 = vmatpush1.bf16.msra.mxu0 0
        %1391 = vmatprep.subr.bf16.mxu0 0
        %1392 = vmatpush1.bf16.msra.mxu0 0
        %1393 = vmatprep.subr.bf16.mxu0 0
        %1394 = vmatpush1.bf16.msra.mxu0 0
        %1395 = vmatprep.subr.bf16.mxu0 0
        %1396 = vmatpush1.bf16.msra.mxu0 0
        %1397 = vmatprep.subr.bf16.mxu0 0
        %1398 = vmatpush1.bf16.msra.mxu0 0
        %1399 = vmatprep.mubr.bf16.mxu0 0
        %1400 = vmatmul.mubr.bf16.gmra.mrb[0].mxu0 %v1365
        %v1401 = vpop.f32.mrb[0].mxu0
        %v1402 = vadd.f32 %v1350, %v1401
        %v1403 = vpop.f32.mrb[0].mxu0
        %v1404 = vpop.f32.mrb[0].mxu0
        %v1405 = vpop.f32.mrb[0].mxu0
        %1406 = vdwg.mxu0
        %1407 = vst.msk [vmem:[%s272] sm:$0xff] %vm298, %v1402
        %s1408 = sand.u32 %s124, 1
        %s1409 = scalar_lea.sflag [#allocation6], %s1408
        %s1410 = sand.u32 %s124, 1
        %s1411 = smul.addr %s1410, 8
        %s1412 = scalar_lea.vmem [#allocation10], %s1411
        %s1413 = sand.u32 %s150, 1
        %s1414 = scalar_lea.sflag [#allocation12], %s1413
        %s1415 = sand.u32 %s150, 1
        %s1416 = smul.addr %s1415, 32
        %s1417 = scalar_lea.vmem [#allocation11], %s1416
        // Predicated region
        $region49: #{tpu_custom_call.1} parent=35 // pred_check
          %p1418 = pneg %p134
        $region50: #{tpu_custom_call.1} parent=35 // pred_check_branch
          %1420 = sbr.rel (%p1418) target = $region52
        $region51: #{tpu_custom_call.1} parent=35 // pred_region
          %s1422 = ssub.s32 128, 128
          %1423 = vsyncadd %s1409, %s1422
          %s1424 = smul.addr %s27, 128
          %s1425 = scalar_lea.hbm %s4, %s1424
          %s1427 = sshll.u32 %s1412, 4
          %s1428 = int_to_ptr.vmem [resolvable:$true] %s1427
          %1430 = dma.vmem_to_hbm [thread:$0]  %s1428, 128, %s1425, %s1409
        $region52: #{tpu_custom_call.1} parent=35 // pred_fallthru
          _
        // Predicated region
        $region53: #{tpu_custom_call.1} parent=35 // pred_check
          %p1431 = pneg %p160
        $region54: #{tpu_custom_call.1} parent=35 // pred_check_branch
          %1433 = sbr.rel (%p1431) target = $region56
        $region55: #{tpu_custom_call.1} parent=35 // pred_region
          %s1435 = ssub.s32 512, 512
          %1436 = vsyncadd %s1414, %s1435
          %s1437 = smul.addr %s27, 8
          %s1438 = smul.addr %s1437, 64
          %s1439 = scalar_lea.hbm %s5, %s1438
          %s1440 = sshll.u32 %s1417, 4
          %s1441 = int_to_ptr.vmem [resolvable:$true] %s1440
          %1446 = dma.vmem_to_hbm [thread:$0]  %s1441, 512, %s1439, %s1414, 64, 64, 4
        $region56: #{tpu_custom_call.1} parent=35 // pred_fallthru
          _
      $region36: #{tpu_custom_call.1} parent=5 // pred_fallthru
        _
      %p1447 = scmp.le.s32.totalorder 2, %s22
      // Predicated region
      $region57: #{tpu_custom_call.1} parent=5 // pred_check
        %p1448 = pneg %p1447
      $region58: #{tpu_custom_call.1} parent=5 // pred_check_branch
        %1450 = sbr.rel (%p1448) target = $region60
      $region59: #{tpu_custom_call.1} parent=5 // pred_region
        %s1451 = ssub.s32 %s22, 2
        // Predicated region
        $region61: #{tpu_custom_call.1} parent=59 // pred_check
          %p1452 = pneg %p140
        $region62: #{tpu_custom_call.1} parent=59 // pred_check_branch
          %1454 = sbr.rel (%p1452) target = $region64
        $region63: #{tpu_custom_call.1} parent=59 // pred_region
          %s1455 = sand.u32 %s125, 1
          %s1456 = scalar_lea.sflag [#allocation6], %s1455
          %s1457 = sand.u32 %s125, 1
          %s1458 = smul.addr %s1457, 8
          %s1459 = scalar_lea.vmem [#allocation10], %s1458
          %1460 = dma.done %s1456, 128
        $region64: #{tpu_custom_call.1} parent=59 // pred_fallthru
          _
        // Predicated region
        $region65: #{tpu_custom_call.1} parent=59 // pred_check
          %p1461 = pneg %p166
        $region66: #{tpu_custom_call.1} parent=59 // pred_check_branch
          %1463 = sbr.rel (%p1461) target = $region68
        $region67: #{tpu_custom_call.1} parent=59 // pred_region
          %s1464 = sand.u32 %s151, 1
          %s1465 = scalar_lea.sflag [#allocation12], %s1464
          %s1466 = sand.u32 %s151, 1
          %s1467 = smul.addr %s1466, 32
          %s1468 = scalar_lea.vmem [#allocation11], %s1467
          %1469 = dma.done %s1465, 512
        $region68: #{tpu_custom_call.1} parent=59 // pred_fallthru
          _
      $region60: #{tpu_custom_call.1} parent=5 // pred_fallthru
        _
    $region6: #{tpu_custom_call.1} parent=1 // loop_footer
      %s26 = sadd.s32 1, %s22
    $region7: #{tpu_custom_call.1} parent=1 // loop_footer_branch
      %21 = sbr.rel target = $region3
    $region8: #{tpu_custom_call.1} parent=1 // loop_exit
      _
    %1470 = vsyncpa [#allocation5], 1
    %s1471 = scalar_lea.sflag [#allocation5], 1
    %1472 = vsyncpa %s1471, 1
    %1473 = vsyncpa [#allocation8], 1
    %1474 = vsyncpa [#allocation6], 1
    %s1475 = scalar_lea.sflag [#allocation6], 1
    %1476 = vsyncpa %s1475, 1
    %1477 = vsyncpa [#allocation12], 1
    %s1478 = scalar_lea.sflag [#allocation12], 1
    %1479 = vsyncpa %s1478, 1

</llo_original>
